<compile_context>
chip_gen: v5e
topology: v5e:2x2
jax: 0.10.0
libtpu: 0.0.40
codegen_flags: <defaults>
</compile_context>

<pallas_src>
import functools

import jax
import jax.numpy as jnp
from jax import lax
from jax.experimental import pallas as pl
from jax.experimental.pallas import tpu as pltpu

_NEG_BIG = -1e30   # finite "minus infinity" for masked maxima (keeps exp() NaN-free)


def _msl_kernel(lhs_ref, rhs_ref, cls_col_ref, cls_row_ref, out_ref,
                dT_ref, m_ref, s_ref, *, inv_temp, tm, tn, batch, rhs_resident):
    i = pl.program_id(0)              # row-tile index    (anchors)
    k = pl.program_id(1)              # column-tile index (candidates)
    col0 = pl.multiple_of(k * tn, tn)

    # ---- per-row-tile init of the online negatives statistics ---------------
    @pl.when(k == 0)
    def _init():
        m_ref[...] = jnp.full((1, tm), _NEG_BIG, jnp.float32)
        s_ref[...] = jnp.zeros((1, tm), jnp.float32)

    # ---- MXU phase: one (tn, tm) tile of d^T per grid step -------------------
    if rhs_resident:
        rhs = rhs_ref[pl.ds(col0, tn), :]          # slice resident (B_pad, H)
    else:
        rhs = rhs_ref[...]                         # streamed (tn, H) tile
    # bf16 x bf16 -> f32 accumulate.  Element (c, r) = d[i*tm + r, k*tn + c].
    # 1/temperature is applied to the f32 result (no extra bf16 rounding).
    dT_tile = lax.dot_general(rhs, lhs_ref[...], (((1,), (1,)), ((), ())),
                              preferred_element_type=jnp.float32) * inv_temp
    dT_ref[pl.ds(col0, tn), :] = dT_tile           # (tn, tm) slab of the strip

    # ---- online negatives max / denominator (overlaps with MXU) -------------
    cls_row = cls_row_ref[0]                                   # (1, tm) anchors
    cls_col_t = cls_col_ref[pl.ds(col0, tn), :]                # (tn, 1) candidates
    cand_idx = col0 + lax.broadcasted_iota(jnp.int32, (tn, 1), 0)
    # negatives = different class AND a real (non-padding) candidate row
    neg_mask = jnp.logical_and(cls_col_t != cls_row, cand_idx < batch)

    d_negs = jnp.where(neg_mask, dT_tile, _NEG_BIG)
    tile_max = jnp.max(d_negs, axis=0, keepdims=True)          # (1, tm)
    m_old = m_ref[...]
    m_new = jnp.maximum(m_old, tile_max)
    p = jnp.where(neg_mask, jnp.exp(d_negs - m_new), 0.0)      # <= 1, NaN-free
    s_ref[...] = s_ref[...] * jnp.exp(m_old - m_new) + jnp.sum(p, axis=0,
                                                               keepdims=True)
    m_ref[...] = m_new

    # ---- finalize: softplus pass over the (B_pad, tm) strip ------------------
    @pl.when(k == pl.num_programs(1) - 1)
    def _finalize():
        d = dT_ref[...]                            # (B_pad, tm): d[j, r]
        cls_col = cls_col_ref[...]                 # (B_pad, 1)
        same = cls_col == cls_row                  # positives (+ self pairs)
        # c[r] = m_neg[r] + log(nsum[r]);  loss = softplus(c - d)   (exact)
        c = m_ref[...] + jnp.log(s_ref[...])       # (1, tm); -inf if no negatives
        z = c - d
        loss = jnp.maximum(z, 0.0) + jnp.log(1.0 + jnp.exp(-jnp.abs(z)))
        total = jnp.sum(jnp.where(same, loss, 0.0))

        # Remove the self-pair (diagonal) contribution: only the tm x tm
        # sub-block at rows [i*tm, i*tm + tm) can contain diagonal entries.
        row0 = pl.multiple_of(i * tm, 8)
        d_sub = dT_ref[pl.ds(row0, tm), :]         # (tm, tm)
        z_sub = c - d_sub
        loss_sub = jnp.maximum(z_sub, 0.0) + jnp.log(1.0 + jnp.exp(-jnp.abs(z_sub)))
        eye = (lax.broadcasted_iota(jnp.int32, (tm, tm), 0)
               == lax.broadcasted_iota(jnp.int32, (tm, tm), 1))
        total = total - jnp.sum(jnp.where(eye, loss_sub, 0.0))

        # Lane-dense per-row-tile partial sum (wrapper reads [i, 0, 0]).
        out_ref[...] = jnp.zeros((1, 8, 128), jnp.float32) + total


def _round_up(x, m):
    return ((x + m - 1) // m) * m


def _pick_tile(n, cap):
    """Largest multiple of 128 that divides n (n must be a multiple of 128)."""
    best, d, cap = 128, 128, min(cap, n)
    while d <= cap:
        if n % d == 0:
            best = d
        d += 128
    return best


def matching_softmax_loss(embeddings, classes, temperature=0.05, *,
                          tm=None, tn=None, mxu_dtype=jnp.bfloat16):
    """embeddings: (B, H) float; classes: (B,) int -> scalar float32 loss."""
    B, H = embeddings.shape
    classes = classes.astype(jnp.int32)

    # ---- pad batch to a multiple of 128 -> (8,128)-aligned, lane-dense tiles -
    B_pad = _round_up(max(B, 128), 128)
    pad = B_pad - B
    e = embeddings.astype(mxu_dtype)
    if pad:
        e = jnp.concatenate([e, jnp.zeros((pad, H), mxu_dtype)], axis=0)
        # Distinct sentinel classes: padding never forms a positive pair; it is
        # excluded from negatives inside the kernel by global candidate index.
        pad_cls = classes.max() + 1 + jnp.arange(pad, dtype=jnp.int32)
        cls_pad = jnp.concatenate([classes, pad_cls], axis=0)
    else:
        cls_pad = classes

    # ---- generation-aware VMEM budget ----------------------------------------
    try:
        phys_vmem = int(pltpu.get_tpu_info().vmem_capacity_bytes)
    except Exception:
        phys_vmem = 64 * 2**20
    vmem_cap = int(phys_vmem * 0.8)            # leave Mosaic internal headroom

    if tm is None:
        tm = _pick_tile(B_pad, 256)            # anchors per row tile (lane dim)
        # keep the f32 strip + finalize temporaries inside the budget
        while tm > 128 and 6 * B_pad * tm * 4 > vmem_cap // 2:
            tm = _pick_tile(B_pad, tm - 128)
    if tn is None:
        tn = _pick_tile(B_pad, 1024)           # candidates per column tile
    assert B_pad % tm == 0 and B_pad % tn == 0, (B_pad, tm, tn)
    assert tm % 128 == 0 and tn % 128 == 0, (tm, tn)
    rt, kt = B_pad // tm, B_pad // tn

    itemsize = jnp.dtype(mxu_dtype).itemsize
    # Keep the candidate operand resident in VMEM (one HBM pass) when it fits.
    rhs_resident = 2 * B_pad * H * itemsize <= vmem_cap // 4

    cls_col = cls_pad.reshape(B_pad, 1)        # candidate classes, resident
    cls_row = cls_pad.reshape(rt, 1, tm)       # anchor classes, per row tile

    kernel = functools.partial(_msl_kernel, inv_temp=float(1.0 / temperature),
                               tm=tm, tn=tn, batch=B, rhs_resident=rhs_resident)

    strip_bytes = B_pad * tm * 4
    rhs_bytes = (2 * B_pad * H * itemsize if rhs_resident
                 else 4 * tn * H * itemsize)
    vmem_est = (5 * strip_bytes                         # strip + finalize temps
                + 2 * tm * H * itemsize + rhs_bytes     # operand buffers
                + 2 * B_pad * 128 * 4                   # lane-padded class column
                + 4 * 8 * 128 * 4)                      # output / small blocks
    vmem_limit = int(min(vmem_cap, max(16 * 2**20, int(1.3 * vmem_est))))

    if rhs_resident:
        rhs_spec = pl.BlockSpec((B_pad, H), lambda i, k: (0, 0))
    else:
        rhs_spec = pl.BlockSpec((tn, H), lambda i, k: (k, 0))

    grid_spec = pltpu.PrefetchScalarGridSpec(
        num_scalar_prefetch=0,
        grid=(rt, kt),
        in_specs=[
            pl.BlockSpec((tm, H), lambda i, k: (i, 0)),         # anchor rows of E
            rhs_spec,                                           # candidate rows of E
            pl.BlockSpec((B_pad, 1), lambda i, k: (0, 0)),      # classes (resident)
            pl.BlockSpec((1, 1, tm), lambda i, k: (i, 0, 0)),   # row-tile classes
        ],
        out_specs=pl.BlockSpec((1, 8, 128), lambda i, k: (i, 0, 0)),
        scratch_shapes=[pltpu.VMEM((B_pad, tm), jnp.float32),   # d^T strip
                        pltpu.VMEM((1, tm), jnp.float32),       # running neg max
                        pltpu.VMEM((1, tm), jnp.float32)],      # running neg sum
    )
    partial_sums = pl.pallas_call(
        kernel,
        out_shape=jax.ShapeDtypeStruct((rt, 8, 128), jnp.float32),
        grid_spec=grid_spec,
        compiler_params=pltpu.CompilerParams(
            dimension_semantics=("parallel", "arbitrary"),
            vmem_limit_bytes=vmem_limit),
    )(e, e, cls_col, cls_row)

    total = jnp.sum(partial_sums[:, 0, 0])
    # Positive-pair count from the original labels: exact int32, zero-guarded.
    n_pos = jnp.sum((classes[:, None] == classes[None, :]).astype(jnp.int32)) - B
    return total / jnp.maximum(n_pos, 1).astype(jnp.float32)


def _reference_loss(embeddings, classes, temperature=0.05, op_dtype=jnp.bfloat16):
    """Pure-JAX reference (op_dtype=bfloat16 mirrors the kernel's MXU numerics,
    op_dtype=float32 is the faithful full-precision reference)."""
    e = embeddings.astype(op_dtype)
    d = lax.dot_general(e, e, (((1,), (1,)), ((), ())),
                        preferred_element_type=jnp.float32) * (1.0 / temperature)
    B = d.shape[0]
    same = classes[:, None] == classes[None, :]
    pos = same & ~jnp.eye(B, dtype=bool)
    neg = ~same
    m_neg = jnp.max(jnp.where(neg, d, -jnp.inf), axis=1, keepdims=True)
    nsum = jnp.sum(jnp.where(neg, jnp.exp(d - m_neg), 0.0), axis=1, keepdims=True)
    z = (m_neg + jnp.log(nsum)) - d
    loss = jnp.maximum(z, 0.0) + jnp.log1p(jnp.exp(-jnp.abs(z)))
    return jnp.sum(jnp.where(pos, loss, 0.0)) / jnp.maximum(jnp.sum(pos), 1)


if __name__ == "__main__":
    key = jax.random.PRNGKey(0)
    B, H = 200, 64                                   # pads to B_pad=256
    emb = jax.random.normal(key, (B, H), dtype=jnp.float32)
    # L2-normalize: the cosine-similarity regime this loss is used in.
    emb = emb / jnp.linalg.norm(emb, axis=1, keepdims=True)
    classes = jnp.arange(B, dtype=jnp.int32) % 8     # 8 classes x 25 samples

    # tm=tn=128 -> padded B=256 gives a real 2x2 grid (exercises padding, the
    # online accumulation across column tiles, and the resident-rhs slicing).
    loss = matching_softmax_loss(emb, classes, temperature=0.05, tm=128, tn=128)
    jax.block_until_ready(loss)

    ref_bf16 = _reference_loss(emb, classes, 0.05, jnp.bfloat16)  # same MXU numerics
    ref_f32 = _reference_loss(emb, classes, 0.05, jnp.float32)    # full precision
    assert jnp.isfinite(loss), loss
    assert jnp.allclose(loss, ref_bf16, rtol=2e-3, atol=2e-3), (loss, ref_bf16)
    assert jnp.allclose(loss, ref_f32, rtol=5e-2, atol=5e-2), (loss, ref_f32)
    print("KERNEL_OK")
</pallas_src>

<mosaic_0001>
module attributes {stable_mosaic.version = 11 : i64} {
  func.func @_msl_kernel(%arg0: i32, %arg1: i32, %arg2: memref<128x64xbf16, #tpu.memory_space<vmem>>, %arg3: memref<256x64xbf16, #tpu.memory_space<vmem>>, %arg4: memref<256x1xi32, #tpu.memory_space<vmem>>, %arg5: memref<1x1x128xi32, #tpu.memory_space<vmem>>, %arg6: memref<1x8x128xf32, #tpu.memory_space<vmem>>, %arg7: memref<256x128xf32, #tpu.memory_space<vmem>>, %arg8: memref<1x128xf32, #tpu.memory_space<vmem>>, %arg9: memref<1x128xf32, #tpu.memory_space<vmem>>) attributes {dimension_semantics = [#tpu.dimension_semantics<parallel>, #tpu.dimension_semantics<arbitrary>], iteration_bounds = array<i64: 2, 2>, scalar_prefetch = 0 : i64, scratch_operands = 3 : i64, tpu.core_type = #tpu.core_type<tc>, window_params = [{transform_indices = @transform_0, window_bounds = array<i64: 128, 64>}, {pipeline_mode = #tpu.pipeline_mode<synchronous>, transform_indices = @transform_1, window_bounds = array<i64: 256, 64>}, {pipeline_mode = #tpu.pipeline_mode<synchronous>, transform_indices = @transform_2, window_bounds = array<i64: 256, 1>}, {transform_indices = @transform_3, window_bounds = array<i64: 1, 1, 128>}, {transform_indices = @transform_4, window_bounds = array<i64: 1, 8, 128>}]} {
    %c128_i32 = arith.constant 128 : i32
    %0 = arith.muli %arg1, %c128_i32 : i32
    %1 = tpu.assume_multiple %0, 128 : i32
    %c0_i32 = arith.constant 0 : i32
    %2 = arith.cmpi eq, %arg1, %c0_i32 : i32
    %3 = arith.extui %2 : i1 to i32
    %c0_i32_0 = arith.constant 0 : i32
    %4 = arith.cmpi ne, %3, %c0_i32_0 : i32
    scf.if %4 {
      %cst_22 = arith.constant -1.000000e+30 : f32
      %50 = vector.broadcast %cst_22 : f32 to vector<1x128xf32>
      %c0_23 = arith.constant 0 : index
      %c0_24 = arith.constant 0 : index
      %51 = vector.load %arg8[%c0_23, %c0_24] : memref<1x128xf32, #tpu.memory_space<vmem>>, vector<1x128xf32>
      tpu.vector_store %arg8[%c0_23, %c0_24], %50 {strides = array<i32>} : memref<1x128xf32, #tpu.memory_space<vmem>>, vector<1x128xf32>,
      %cst_25 = arith.constant 0.000000e+00 : f32
      %52 = vector.broadcast %cst_25 : f32 to vector<1x128xf32>
      %c0_26 = arith.constant 0 : index
      %c0_27 = arith.constant 0 : index
      %53 = vector.load %arg9[%c0_26, %c0_27] : memref<1x128xf32, #tpu.memory_space<vmem>>, vector<1x128xf32>
      tpu.vector_store %arg9[%c0_26, %c0_27], %52 {strides = array<i32>} : memref<1x128xf32, #tpu.memory_space<vmem>>, vector<1x128xf32>,
    } else {
    }
    %5 = arith.index_cast %1 : i32 to index
    %c0 = arith.constant 0 : index
    %6 = vector.load %arg3[%5, %c0] : memref<256x64xbf16, #tpu.memory_space<vmem>>, vector<128x64xbf16>
    %c0_1 = arith.constant 0 : index
    %c0_2 = arith.constant 0 : index
    %7 = vector.load %arg2[%c0_1, %c0_2] : memref<128x64xbf16, #tpu.memory_space<vmem>>, vector<128x64xbf16>
    %cst = arith.constant dense<0.000000e+00> : vector<128x128xf32>
    %8 = tpu.matmul %6, %7, %cst {dimension_numbers = #tpu.dot_dimension_numbers<[1], [1], [0], [0], [0, 0, 1, 0], [], []>} : vector<128x64xbf16>, vector<128x64xbf16>, vector<128x128xf32> -> vector<128x128xf32>
    %cst_3 = arith.constant 2.000000e+01 : f32
    %9 = vector.broadcast %cst_3 : f32 to vector<128x128xf32>
    %10 = arith.mulf %8, %9 : vector<128x128xf32>
    %11 = arith.index_cast %1 : i32 to index
    %c0_4 = arith.constant 0 : index
    %12 = vector.load %arg7[%11, %c0_4] : memref<256x128xf32, #tpu.memory_space<vmem>>, vector<128x128xf32>
    tpu.vector_store %arg7[%11, %c0_4], %10 {strides = array<i32>} : memref<256x128xf32, #tpu.memory_space<vmem>>, vector<128x128xf32>,
    %c0_5 = arith.constant 0 : index
    %c0_6 = arith.constant 0 : index
    %c0_7 = arith.constant 0 : index
    %13 = vector.load %arg5[%c0_5, %c0_6, %c0_7] : memref<1x1x128xi32, #tpu.memory_space<vmem>>, vector<1x1x128xi32>
    %14 = vector.shape_cast %13 : vector<1x1x128xi32> to vector<1x128xi32>
    %15 = arith.index_cast %1 : i32 to index
    %c0_8 = arith.constant 0 : index
    %16 = vector.load %arg4[%15, %c0_8] : memref<256x1xi32, #tpu.memory_space<vmem>>, vector<128x1xi32>
    %17 = tpu.iota {dimensions = array<i32: 0>} : vector<128x1xi32>
    %18 = vector.broadcast %1 : i32 to vector<128x1xi32>
    %19 = arith.addi %18, %17 : vector<128x1xi32>
    %20 = vector.broadcast %16 : vector<128x1xi32> to vector<128x128xi32>
    %21 = vector.broadcast %14 : vector<1x128xi32> to vector<128x128xi32>
    %22 = arith.cmpi ne, %20, %21 : vector<128x128xi32>
    %c200_i32 = arith.constant 200 : i32
    %23 = vector.broadcast %c200_i32 : i32 to vector<128x1xi32>
    %24 = arith.cmpi slt, %19, %23 : vector<128x1xi32>
    %25 = vector.broadcast %24 : vector<128x1xi1> to vector<128x128xi1>
    %26 = arith.andi %22, %25 : vector<128x128xi1>
    %cst_9 = arith.constant -1.000000e+30 : f32
    %27 = vector.broadcast %cst_9 : f32 to vector<128x128xf32>
    %28 = arith.select %26, %10, %27 : vector<128x128xi1>, vector<128x128xf32>
    %cst_10 = arith.constant dense<0xFF800000> : vector<128xf32>
    %29 = vector.multi_reduction <maximumf>, %28, %cst_10 [0] : vector<128x128xf32> to vector<128xf32>
    %30 = vector.shape_cast %29 : vector<128xf32> to vector<1x128xf32>
    %c0_11 = arith.constant 0 : index
    %c0_12 = arith.constant 0 : index
    %31 = vector.load %arg8[%c0_11, %c0_12] : memref<1x128xf32, #tpu.memory_space<vmem>>, vector<1x128xf32>
    %32 = arith.maximumf %31, %30 : vector<1x128xf32>
    %33 = vector.broadcast %32 : vector<1x128xf32> to vector<128x128xf32>
    %34 = arith.subf %28, %33 : vector<128x128xf32>
    %35 = math.exp %34 : vector<128x128xf32>
    %cst_13 = arith.constant 0.000000e+00 : f32
    %36 = vector.broadcast %cst_13 : f32 to vector<128x128xf32>
    %37 = arith.select %26, %35, %36 : vector<128x128xi1>, vector<128x128xf32>
    %c0_14 = arith.constant 0 : index
    %c0_15 = arith.constant 0 : index
    %38 = vector.load %arg9[%c0_14, %c0_15] : memref<1x128xf32, #tpu.memory_space<vmem>>, vector<1x128xf32>
    %39 = arith.subf %31, %32 : vector<1x128xf32>
    %40 = math.exp %39 : vector<1x128xf32>
    %41 = arith.mulf %38, %40 : vector<1x128xf32>
    %cst_16 = arith.constant dense<0.000000e+00> : vector<128xf32>
    %42 = vector.multi_reduction <add>, %37, %cst_16 [0] : vector<128x128xf32> to vector<128xf32>
    %43 = vector.shape_cast %42 : vector<128xf32> to vector<1x128xf32>
    %44 = arith.addf %41, %43 : vector<1x128xf32>
    %c0_17 = arith.constant 0 : index
    %c0_18 = arith.constant 0 : index
    %45 = vector.load %arg9[%c0_17, %c0_18] : memref<1x128xf32, #tpu.memory_space<vmem>>, vector<1x128xf32>
    tpu.vector_store %arg9[%c0_17, %c0_18], %44 {strides = array<i32>} : memref<1x128xf32, #tpu.memory_space<vmem>>, vector<1x128xf32>,
    %c0_19 = arith.constant 0 : index
    %c0_20 = arith.constant 0 : index
    %46 = vector.load %arg8[%c0_19, %c0_20] : memref<1x128xf32, #tpu.memory_space<vmem>>, vector<1x128xf32>
    tpu.vector_store %arg8[%c0_19, %c0_20], %32 {strides = array<i32>} : memref<1x128xf32, #tpu.memory_space<vmem>>, vector<1x128xf32>,
    %c1_i32 = arith.constant 1 : i32
    %47 = arith.cmpi eq, %arg1, %c1_i32 : i32
    %48 = arith.extui %47 : i1 to i32
    %c0_i32_21 = arith.constant 0 : i32
    %49 = arith.cmpi ne, %48, %c0_i32_21 : i32
    scf.if %49 {
      %c0_22 = arith.constant 0 : index
      %c0_23 = arith.constant 0 : index
      %50 = vector.load %arg7[%c0_22, %c0_23] : memref<256x128xf32, #tpu.memory_space<vmem>>, vector<256x128xf32>
      %c0_24 = arith.constant 0 : index
      %c0_25 = arith.constant 0 : index
      %51 = vector.load %arg4[%c0_24, %c0_25] : memref<256x1xi32, #tpu.memory_space<vmem>>, vector<256x1xi32>
      %52 = vector.broadcast %51 : vector<256x1xi32> to vector<256x128xi32>
      %53 = vector.broadcast %14 : vector<1x128xi32> to vector<256x128xi32>
      %54 = arith.cmpi eq, %52, %53 : vector<256x128xi32>
      %c0_26 = arith.constant 0 : index
      %c0_27 = arith.constant 0 : index
      %55 = vector.load %arg8[%c0_26, %c0_27] : memref<1x128xf32, #tpu.memory_space<vmem>>, vector<1x128xf32>
      %c0_28 = arith.constant 0 : index
      %c0_29 = arith.constant 0 : index
      %56 = vector.load %arg9[%c0_28, %c0_29] : memref<1x128xf32, #tpu.memory_space<vmem>>, vector<1x128xf32>
      %57 = math.log %56 : vector<1x128xf32>
      %58 = arith.addf %55, %57 : vector<1x128xf32>
      %59 = vector.broadcast %58 : vector<1x128xf32> to vector<256x128xf32>
      %60 = arith.subf %59, %50 : vector<256x128xf32>
      %cst_30 = arith.constant 0.000000e+00 : f32
      %61 = vector.broadcast %cst_30 : f32 to vector<256x128xf32>
      %62 = arith.maximumf %60, %61 : vector<256x128xf32>
      %63 = math.absf %60 : vector<256x128xf32>
      %cst_31 = arith.constant 0.000000e+00 : f32
      %64 = vector.broadcast %cst_31 : f32 to vector<256x128xf32>
      %65 = arith.subf %64, %63 : vector<256x128xf32>
      %66 = math.exp %65 : vector<256x128xf32>
      %cst_32 = arith.constant 1.000000e+00 : f32
      %67 = vector.broadcast %cst_32 : f32 to vector<256x128xf32>
      %68 = arith.addf %67, %66 : vector<256x128xf32>
      %69 = math.log %68 : vector<256x128xf32>
      %70 = arith.addf %62, %69 : vector<256x128xf32>
      %cst_33 = arith.constant 0.000000e+00 : f32
      %71 = vector.broadcast %cst_33 : f32 to vector<256x128xf32>
      %72 = arith.select %54, %70, %71 : vector<256x128xi1>, vector<256x128xf32>
      %73 = vector.shape_cast %72 : vector<256x128xf32> to vector<1x256x128xf32>
      %cst_34 = arith.constant dense<0.000000e+00> : vector<1xf32>
      %74 = vector.multi_reduction <add>, %73, %cst_34 [1, 2] : vector<1x256x128xf32> to vector<1xf32>
      %75 = vector.shape_cast %74 : vector<1xf32> to vector<1x1x1xf32>
      %76 = vector.extract %75[0, 0, 0] : f32 from vector<1x1x1xf32>
      %c128_i32_35 = arith.constant 128 : i32
      %77 = arith.muli %arg0, %c128_i32_35 : i32
      %78 = tpu.assume_multiple %77, 8 : i32
      %79 = arith.index_cast %78 : i32 to index
      %c0_36 = arith.constant 0 : index
      %80 = vector.load %arg7[%79, %c0_36] : memref<256x128xf32, #tpu.memory_space<vmem>>, vector<128x128xf32>
      %81 = vector.broadcast %58 : vector<1x128xf32> to vector<128x128xf32>
      %82 = arith.subf %81, %80 : vector<128x128xf32>
      %cst_37 = arith.constant 0.000000e+00 : f32
      %83 = vector.broadcast %cst_37 : f32 to vector<128x128xf32>
      %84 = arith.maximumf %82, %83 : vector<128x128xf32>
      %85 = math.absf %82 : vector<128x128xf32>
      %cst_38 = arith.constant 0.000000e+00 : f32
      %86 = vector.broadcast %cst_38 : f32 to vector<128x128xf32>
      %87 = arith.subf %86, %85 : vector<128x128xf32>
      %88 = math.exp %87 : vector<128x128xf32>
      %cst_39 = arith.constant 1.000000e+00 : f32
      %89 = vector.broadcast %cst_39 : f32 to vector<128x128xf32>
      %90 = arith.addf %89, %88 : vector<128x128xf32>
      %91 = math.log %90 : vector<128x128xf32>
      %92 = arith.addf %84, %91 : vector<128x128xf32>
      %93 = tpu.iota {dimensions = array<i32: 0>} : vector<128x128xi32>
      %94 = tpu.iota {dimensions = array<i32: 1>} : vector<128x128xi32>
      %95 = arith.cmpi eq, %93, %94 : vector<128x128xi32>
      %cst_40 = arith.constant 0.000000e+00 : f32
      %96 = vector.broadcast %cst_40 : f32 to vector<128x128xf32>
      %97 = arith.select %95, %92, %96 : vector<128x128xi1>, vector<128x128xf32>
      %98 = vector.shape_cast %97 : vector<128x128xf32> to vector<1x128x128xf32>
      %cst_41 = arith.constant dense<0.000000e+00> : vector<1xf32>
      %99 = vector.multi_reduction <add>, %98, %cst_41 [1, 2] : vector<1x128x128xf32> to vector<1xf32>
      %100 = vector.shape_cast %99 : vector<1xf32> to vector<1x1x1xf32>
      %101 = vector.extract %100[0, 0, 0] : f32 from vector<1x1x1xf32>
      %102 = arith.subf %76, %101 : f32
      %cst_42 = arith.constant 0.000000e+00 : f32
      %103 = vector.broadcast %cst_42 : f32 to vector<1x8x128xf32>
      %104 = vector.broadcast %102 : f32 to vector<1x8x128xf32>
      %105 = arith.addf %103, %104 : vector<1x8x128xf32>
      %c0_43 = arith.constant 0 : index
      %c0_44 = arith.constant 0 : index
      %c0_45 = arith.constant 0 : index
      %106 = vector.load %arg6[%c0_43, %c0_44, %c0_45] : memref<1x8x128xf32, #tpu.memory_space<vmem>>, vector<1x8x128xf32>
      tpu.vector_store %arg6[%c0_43, %c0_44, %c0_45], %105 {strides = array<i32>} : memref<1x8x128xf32, #tpu.memory_space<vmem>>, vector<1x8x128xf32>,
    } else {
    }
    return
  }
  func.func @transform_0(%arg0: i32, %arg1: i32) -> (i32, i32) {
    %c0_i32 = arith.constant 0 : i32
    %c0_i32_0 = arith.constant 0 : i32
    return %arg0, %c0_i32 : i32, i32
  }
  func.func @transform_1(%arg0: i32, %arg1: i32) -> (i32, i32) {
    %c0_i32 = arith.constant 0 : i32
    %c0_i32_0 = arith.constant 0 : i32
    %c0_i32_1 = arith.constant 0 : i32
    return %c0_i32, %c0_i32_0 : i32, i32
  }
  func.func @transform_2(%arg0: i32, %arg1: i32) -> (i32, i32) {
    %c0_i32 = arith.constant 0 : i32
    %c0_i32_0 = arith.constant 0 : i32
    %c0_i32_1 = arith.constant 0 : i32
    return %c0_i32, %c0_i32_0 : i32, i32
  }
  func.func @transform_3(%arg0: i32, %arg1: i32) -> (i32, i32, i32) {
    %c0_i32 = arith.constant 0 : i32
    %c0_i32_0 = arith.constant 0 : i32
    %c0_i32_1 = arith.constant 0 : i32
    return %arg0, %c0_i32, %c0_i32_0 : i32, i32, i32
  }
  func.func @transform_4(%arg0: i32, %arg1: i32) -> (i32, i32, i32) {
    %c0_i32 = arith.constant 0 : i32
    %c0_i32_0 = arith.constant 0 : i32
    %c0_i32_1 = arith.constant 0 : i32
    return %arg0, %c0_i32, %c0_i32_0 : i32, i32, i32
  }
}

</mosaic_0001>

<llo_original>
// kernel: tpu_custom_call.1
$region0: #{tpu_custom_call.1}
  #allocation0 [shape = 'u32[]', space=smem, size = 0x4, offset = 0x4, fixed_abs, tag = 'smem constant byte address 0x4 - core index']
  #allocation1 [shape = 'u32[72,128]{1,0:T(1,128)}', space=vmem, size = 0x9000, scoped, tag = 'internal scratch']
  #allocation2 [shape = 'f32[256,128]{1,0:T(8,128)}', space=vmem, size = 0x20000, scoped, tag = 'scratch operand']
  #allocation3 [shape = 'f32[1,128]{1,0:T(1,128)}', space=vmem, size = 0x200, scoped, tag = 'scratch operand']
  #allocation4 [shape = 'f32[1,128]{1,0:T(1,128)}', space=vmem, size = 0x200, scoped, tag = 'scratch operand']
  %s0 = inlined_call_operand.vmem [shape: bf16[256,64], index: 0, kind: input, shape index: {}]
  %s1 = inlined_call_operand.vmem [shape: bf16[256,64], index: 1, kind: input, shape index: {}]
  %s2 = inlined_call_operand.vmem [shape: s32[256,1], index: 2, kind: input, shape index: {}]
  %s3 = inlined_call_operand.vmem [shape: s32[2,1,128], index: 3, kind: input, shape index: {}]
  %s4 = inlined_call_operand.hbm [shape: f32[2,8,128], index: 4, kind: output, shape index: {}]
  %s5 = sld [smem:[#allocation0]]
  $region57: #{tpu_custom_call.1} parent=0
    _
  %s7 = ssub.s32 1, %s5
  %s8 = scalar_select 0, %s7, %s5
  $region1: #{tpu_custom_call.1} parent=0
    #allocation5 [shape = 'u8[8192]{0}', space=vmem, size = 0x2000, scoped, tag = 'output window, operand 0']
    #allocation6 [shape = 's32[2]{0}', space=sflag, size = 0x8, scoped, tag = 'scoped memory for tpu_custom_call.1']
    %9 = vsyncpa [#allocation6], 0
    %s10 = scalar_lea.sflag [#allocation6], 1
    %11 = vsyncpa %s10, 0
    loop: start=0, step=1, limit=6
    $region2: #{tpu_custom_call.1} parent=1 // loop_pre_header
      _
    $region3: #{tpu_custom_call.1} parent=1 // loop_header
      %s13 = sphi 0, %s17
      %p14 = scmp.ge.s32.totalorder %s13, 6
      %s20 = sphi 0, %s32
      %s21 = sphi 0, %s28
      %s22 = sphi 0, %s20
      %s23 = sphi 0, %s21
      %s24 = sphi 0, %s22
      %s25 = sphi 0, %s23
      %s35 = sphi 0, %s37
      %s38 = sphi 0, %s35
      %s39 = sphi 0, %s38
      %s55 = sphi 0, %s39
      %s59 = sphi 0, %s59
      %s61 = sphi 0, %s59
      %s62 = sphi 0, %s61
      %s76 = sphi 0, %s62
      %s80 = sphi 0, %s80
      %s82 = sphi 0, %s80
      %s83 = sphi 0, %s82
      %s97 = sphi 0, %s83
      %s103 = sphi 0, %s105
      %s106 = sphi 0, %s103
      %s107 = sphi 0, %s106
      %s123 = sphi 0, %s107
      %s129 = sphi 0, %s131
      %s132 = sphi 0, %s129
      %s133 = sphi 0, %s132
      %s149 = sphi 0, %s133
    $region4: #{tpu_custom_call.1} parent=1 // loop_header_branch
      %16 = sbr.rel (%p14) target = $region8
    $region5: #{tpu_custom_call.1} parent=1 // loop_body
      %s18 = ssub.s32 %s13, 1
      %s19 = ssub.s32 %s13, 2
      %s26 = sadd.s32 1, %s21
      %p27 = scmp.ge.s32.totalorder %s26, 2
      %s28 = scalar_select %p27, 0, %s26
      %s29 = sadd.s32 1, %s20
      %s30 = scalar_select %p27, %s29, %s20
      %p31 = scmp.ge.s32.totalorder %s30, 2
      %s32 = scalar_select %p31, 0, %s30
      %s33 = ssub.s32 %s20, %s32
      %p34 = scmp.eq.s32.totalorder %s33, 0
      %s36 = sadd.s32 %s35, 1
      %s37 = scalar_select %p34, %s35, %s36
      %p40 = pneg %p34
      %p41 = scmp.eq.s32.totalorder %s13, 3
      %p42 = por %p40, %p41
      %p43 = scmp.ne.s32.totalorder %s35, %s38
      %p44 = scmp.eq.s32.totalorder %s13, 0
      %p45 = por %p43, %p44
      %p46 = scmp.ne.s32.totalorder %s35, %s38
      %p47 = scmp.eq.s32.totalorder %s18, 3
      %p48 = por %p46, %p47
      %p49 = scmp.ne.s32.totalorder %s38, %s39
      %p50 = scmp.eq.s32.totalorder %s18, 0
      %p51 = por %p49, %p50
      %p52 = scmp.ne.s32.totalorder %s38, %s39
      %p53 = scmp.eq.s32.totalorder %s19, 3
      %p54 = por %p52, %p53
      %p56 = scmp.ne.s32.totalorder %s39, %s55
      %p57 = scmp.eq.s32.totalorder %s19, 0
      %p58 = por %p56, %p57
      %s60 = sadd.s32 %s59, 1
      %p63 = scmp.eq.s32.totalorder %s13, 3
      %p64 = scmp.ne.s32.totalorder %s59, %s61
      %p65 = scmp.eq.s32.totalorder %s13, 0
      %p66 = por %p64, %p65
      %p67 = scmp.ne.s32.totalorder %s59, %s61
      %p68 = scmp.eq.s32.totalorder %s18, 3
      %p69 = por %p67, %p68
      %p70 = scmp.ne.s32.totalorder %s61, %s62
      %p71 = scmp.eq.s32.totalorder %s18, 0
      %p72 = por %p70, %p71
      %p73 = scmp.ne.s32.totalorder %s61, %s62
      %p74 = scmp.eq.s32.totalorder %s19, 3
      %p75 = por %p73, %p74
      %p77 = scmp.ne.s32.totalorder %s62, %s76
      %p78 = scmp.eq.s32.totalorder %s19, 0
      %p79 = por %p77, %p78
      %s81 = sadd.s32 %s80, 1
      %p84 = scmp.eq.s32.totalorder %s13, 3
      %p85 = scmp.ne.s32.totalorder %s80, %s82
      %p86 = scmp.eq.s32.totalorder %s13, 0
      %p87 = por %p85, %p86
      %p88 = scmp.ne.s32.totalorder %s80, %s82
      %p89 = scmp.eq.s32.totalorder %s18, 3
      %p90 = por %p88, %p89
      %p91 = scmp.ne.s32.totalorder %s82, %s83
      %p92 = scmp.eq.s32.totalorder %s18, 0
      %p93 = por %p91, %p92
      %p94 = scmp.ne.s32.totalorder %s82, %s83
      %p95 = scmp.eq.s32.totalorder %s19, 3
      %p96 = por %p94, %p95
      %p98 = scmp.ne.s32.totalorder %s83, %s97
      %p99 = scmp.eq.s32.totalorder %s19, 0
      %p100 = por %p98, %p99
      %s101 = ssub.s32 %s20, %s32
      %p102 = scmp.eq.s32.totalorder %s101, 0
      %s104 = sadd.s32 %s103, 1
      %s105 = scalar_select %p102, %s103, %s104
      %p108 = pneg %p102
      %p109 = scmp.eq.s32.totalorder %s13, 3
      %p110 = por %p108, %p109
      %p111 = scmp.ne.s32.totalorder %s103, %s106
      %p112 = scmp.eq.s32.totalorder %s13, 0
      %p113 = por %p111, %p112
      %p114 = scmp.ne.s32.totalorder %s103, %s106
      %p115 = scmp.eq.s32.totalorder %s18, 3
      %p116 = por %p114, %p115
      %p117 = scmp.ne.s32.totalorder %s106, %s107
      %p118 = scmp.eq.s32.totalorder %s18, 0
      %p119 = por %p117, %p118
      %p120 = scmp.ne.s32.totalorder %s106, %s107
      %p121 = scmp.eq.s32.totalorder %s19, 3
      %p122 = por %p120, %p121
      %p124 = scmp.ne.s32.totalorder %s107, %s123
      %p125 = scmp.eq.s32.totalorder %s19, 0
      %p126 = por %p124, %p125
      %s127 = ssub.s32 %s20, %s32
      %p128 = scmp.eq.s32.totalorder %s127, 0
      %s130 = sadd.s32 %s129, 1
      %s131 = scalar_select %p128, %s129, %s130
      %p134 = pneg %p128
      %p135 = scmp.eq.s32.totalorder %s13, 3
      %p136 = por %p134, %p135
      %p137 = scmp.ne.s32.totalorder %s129, %s132
      %p138 = scmp.eq.s32.totalorder %s13, 0
      %p139 = por %p137, %p138
      %p140 = scmp.ne.s32.totalorder %s129, %s132
      %p141 = scmp.eq.s32.totalorder %s18, 3
      %p142 = por %p140, %p141
      %p143 = scmp.ne.s32.totalorder %s132, %s133
      %p144 = scmp.eq.s32.totalorder %s18, 0
      %p145 = por %p143, %p144
      %p146 = scmp.ne.s32.totalorder %s132, %s133
      %p147 = scmp.eq.s32.totalorder %s19, 3
      %p148 = por %p146, %p147
      %p150 = scmp.ne.s32.totalorder %s133, %s149
      %p151 = scmp.eq.s32.totalorder %s19, 0
      %p152 = por %p150, %p151
      %p153 = scmp.le.s32.totalorder 1, %s13
      %p154 = scmp.lt.s32.totalorder %s13, 5
      %p155 = pnand %p153, %p154
      %p156 = pneg %p155
      // Predicated region
      $region9: #{tpu_custom_call.1} parent=5 // pred_check
        _
      $region10: #{tpu_custom_call.1} parent=5 // pred_check_branch
        %158 = sbr.rel (%p155) target = $region12
      $region11: #{tpu_custom_call.1} parent=5 // pred_region
        %s159 = ssub.s32 %s13, 1
        // Predicated region
        $region13: #{tpu_custom_call.1} parent=11 // pred_check
          %p160 = pneg %p72
        $region14: #{tpu_custom_call.1} parent=11 // pred_check_branch
          %162 = sbr.rel (%p160) target = $region16
        $region15: #{tpu_custom_call.1} parent=11 // pred_region
          _
        $region16: #{tpu_custom_call.1} parent=11 // pred_fallthru
          _
        // Predicated region
        $region17: #{tpu_custom_call.1} parent=11 // pred_check
          %p163 = pneg %p93
        $region18: #{tpu_custom_call.1} parent=11 // pred_check_branch
          %165 = sbr.rel (%p163) target = $region20
        $region19: #{tpu_custom_call.1} parent=11 // pred_region
          _
        $region20: #{tpu_custom_call.1} parent=11 // pred_fallthru
          _
      $region12: #{tpu_custom_call.1} parent=5 // pred_fallthru
        _
      %p166 = scmp.lt.s32.totalorder %s13, 4
      // Predicated region
      $region21: #{tpu_custom_call.1} parent=5 // pred_check
        %p167 = pneg %p166
      $region22: #{tpu_custom_call.1} parent=5 // pred_check_branch
        %169 = sbr.rel (%p167) target = $region24
      $region23: #{tpu_custom_call.1} parent=5 // pred_region
        // Predicated region
        $region25: #{tpu_custom_call.1} parent=23 // pred_check
          %p170 = pneg %p45
        $region26: #{tpu_custom_call.1} parent=23 // pred_check_branch
          %172 = sbr.rel (%p170) target = $region28
        $region27: #{tpu_custom_call.1} parent=23 // pred_region
          %s173 = smul.u32 16, %s20
          %p174 = scmp.lt.s32.totalorder %s173, 31
          %s175 = scalar_select %p174, %s173, 31
          %s176 = smul.addr %s175, 4
          %s177 = scalar_lea.vmem %s0, %s176
          %s178 = smul.u32 16, %s20
        $region28: #{tpu_custom_call.1} parent=23 // pred_fallthru
          _
        // Predicated region
        $region29: #{tpu_custom_call.1} parent=23 // pred_check
          %p179 = pneg %p113
        $region30: #{tpu_custom_call.1} parent=23 // pred_check_branch
          %181 = sbr.rel (%p179) target = $region32
        $region31: #{tpu_custom_call.1} parent=23 // pred_region
          %p182 = scmp.lt.s32.totalorder %s20, 1
          %s183 = scalar_select %p182, %s20, 1
          %s184 = scalar_lea.vmem %s3, %s183
        $region32: #{tpu_custom_call.1} parent=23 // pred_fallthru
          _
      $region24: #{tpu_custom_call.1} parent=5 // pred_fallthru
        _
      %p185 = scmp.le.s32.totalorder 1, %s13
      %p186 = scmp.lt.s32.totalorder %s13, 5
      %p187 = pnand %p185, %p186
      %p188 = pneg %p187
      // Predicated region
      $region33: #{tpu_custom_call.1} parent=5 // pred_check
        _
      $region34: #{tpu_custom_call.1} parent=5 // pred_check_branch
        %190 = sbr.rel (%p187) target = $region36
      $region35: #{tpu_custom_call.1} parent=5 // pred_region
        %s191 = ssub.s32 %s13, 1
        %s192 = smul.u32 16, %s22
        %p193 = scmp.lt.s32.totalorder %s192, 31
        %s194 = scalar_select %p193, %s192, 31
        %s195 = smul.addr %s194, 4
        %s196 = scalar_lea.vmem %s0, %s195
        %p197 = pneg %p51
        %p198 = pneg %p48
        %p199 = pneg %p72
        %p200 = pneg %p69
        %p201 = pneg %p93
        %p202 = pneg %p90
        %p203 = scmp.lt.s32.totalorder %s22, 1
        %s204 = scalar_select %p203, %s22, 1
        %s205 = scalar_lea.vmem %s3, %s204
        %p206 = pneg %p119
        %p207 = pneg %p116
        %p208 = pneg %p145
        %p209 = pneg %p142
        %s210 = sand.u32 %s132, 1
        %s211 = scalar_lea.sflag [#allocation6], %s210
        %s212 = sand.u32 %s132, 1
        %s213 = smul.addr %s212, 8
        %s214 = scalar_lea.vmem [#allocation5], %s213
        %s215 = smul.u32 16, %s22
        %p216 = scmp.lt.s32.totalorder %s215, 31
        %s217 = scalar_select %p216, %s215, 31
        %s218 = smul.addr %s217, 4
        %s219 = scalar_lea.vmem %s0, %s218
        %s220 = smul.u32 16, %s22
        %p221 = scmp.lt.s32.totalorder %s22, 1
        %s222 = scalar_select %p221, %s22, 1
        %s223 = scalar_lea.vmem %s3, %s222
        %s224 = smul.u32 %s23, 128
        %p225 = scmp.eq.s32.totalorder %s23, 0
        // Predicated region
        $region37: #{tpu_custom_call.1} parent=35 // pred_check
          %p226 = pneg %p225
        $region38: #{tpu_custom_call.1} parent=35 // pred_check_branch
          %228 = sbr.rel (%p226) target = $region40
        $region39: #{tpu_custom_call.1} parent=35 // pred_region
          %229 = vst [vmem:[#allocation3] sm:$0x1] -1e+30
          %230 = vst [vmem:[#allocation4] sm:$0x1] 0.0
        $region40: #{tpu_custom_call.1} parent=35 // pred_fallthru
          _
        %s231 = sshra.s32 %s224, 3
        %s232 = sand.u32 %s224, 7
        %s233 = smul.addr %s231, 4
        %s234 = scalar_lea.vmem %s1, %s233
        %v235 = vld [vmem:[%s234] sm:$0xf]
        %v236 = vld [vmem:[%s234 + $0x4] sm:$0xf]
        %v237 = vld [vmem:[%s234 + $0x8] sm:$0xf]
        %v238 = vld [vmem:[%s234 + $0xc] sm:$0xf]
        %v239 = vld [vmem:[%s234 + $0x10] sm:$0xf]
        %v240 = vld [vmem:[%s234 + $0x14] sm:$0xf]
        %v241 = vld [vmem:[%s234 + $0x18] sm:$0xf]
        %v242 = vld [vmem:[%s234 + $0x1c] sm:$0xf]
        %v243 = vld [vmem:[%s234 + $0x20] sm:$0xf]
        %v244 = vld [vmem:[%s234 + $0x24] sm:$0xf]
        %v245 = vld [vmem:[%s234 + $0x28] sm:$0xf]
        %v246 = vld [vmem:[%s234 + $0x2c] sm:$0xf]
        %v247 = vld [vmem:[%s234 + $0x30] sm:$0xf]
        %v248 = vld [vmem:[%s234 + $0x34] sm:$0xf]
        %v249 = vld [vmem:[%s234 + $0x38] sm:$0xf]
        %v250 = vld [vmem:[%s234 + $0x3c] sm:$0xf]
        %v251 = vld [vmem:[%s219] sm:$0xf]
        %v252 = vld [vmem:[%s219 + $0x4] sm:$0xf]
        %v253 = vld [vmem:[%s219 + $0x8] sm:$0xf]
        %v254 = vld [vmem:[%s219 + $0xc] sm:$0xf]
        %v255 = vld [vmem:[%s219 + $0x10] sm:$0xf]
        %v256 = vld [vmem:[%s219 + $0x14] sm:$0xf]
        %v257 = vld [vmem:[%s219 + $0x18] sm:$0xf]
        %v258 = vld [vmem:[%s219 + $0x1c] sm:$0xf]
        %v259 = vld [vmem:[%s219 + $0x20] sm:$0xf]
        %v260 = vld [vmem:[%s219 + $0x24] sm:$0xf]
        %v261 = vld [vmem:[%s219 + $0x28] sm:$0xf]
        %v262 = vld [vmem:[%s219 + $0x2c] sm:$0xf]
        %v263 = vld [vmem:[%s219 + $0x30] sm:$0xf]
        %v264 = vld [vmem:[%s219 + $0x34] sm:$0xf]
        %v265 = vld [vmem:[%s219 + $0x38] sm:$0xf]
        %v266 = vld [vmem:[%s219 + $0x3c] sm:$0xf]
        %v283 = vunpack.c.l.b16 %v235
        %v284 = vunpack.c.l.b16 %v236
        %v285 = vunpack.c.l.b16 %v237
        %v286 = vunpack.c.l.b16 %v238
        %v287 = vunpack.c.l.b16 %v239
        %v288 = vunpack.c.l.b16 %v240
        %v289 = vunpack.c.l.b16 %v241
        %v290 = vunpack.c.l.b16 %v242
        %v291 = vunpack.c.l.b16 %v243
        %v292 = vunpack.c.l.b16 %v244
        %v293 = vunpack.c.l.b16 %v245
        %v294 = vunpack.c.l.b16 %v246
        %v295 = vunpack.c.l.b16 %v247
        %v296 = vunpack.c.l.b16 %v248
        %v297 = vunpack.c.l.b16 %v249
        %v298 = vunpack.c.l.b16 %v250
        %v299 = vpack.c.b16 %v284, %v283
        %v300 = vpack.c.b16 %v286, %v285
        %v301 = vpack.c.b16 %v288, %v287
        %v302 = vpack.c.b16 %v290, %v289
        %v303 = vpack.c.b16 %v292, %v291
        %v304 = vpack.c.b16 %v294, %v293
        %v305 = vpack.c.b16 %v296, %v295
        %v306 = vpack.c.b16 %v298, %v297
        %v323 = vunpack.c.l.b16 %v251
        %v324 = vunpack.c.l.b16 %v252
        %v325 = vunpack.c.l.b16 %v253
        %v326 = vunpack.c.l.b16 %v254
        %v327 = vunpack.c.l.b16 %v255
        %v328 = vunpack.c.l.b16 %v256
        %v329 = vunpack.c.l.b16 %v257
        %v330 = vunpack.c.l.b16 %v258
        %v331 = vunpack.c.l.b16 %v259
        %v332 = vunpack.c.l.b16 %v260
        %v333 = vunpack.c.l.b16 %v261
        %v334 = vunpack.c.l.b16 %v262
        %v335 = vunpack.c.l.b16 %v263
        %v336 = vunpack.c.l.b16 %v264
        %v337 = vunpack.c.l.b16 %v265
        %v338 = vunpack.c.l.b16 %v266
        %v339 = vpack.c.b16 %v324, %v323
        %v340 = vpack.c.b16 %v326, %v325
        %v341 = vpack.c.b16 %v328, %v327
        %v342 = vpack.c.b16 %v330, %v329
        %v343 = vpack.c.b16 %v332, %v331
        %v344 = vpack.c.b16 %v334, %v333
        %v345 = vpack.c.b16 %v336, %v335
        %v346 = vpack.c.b16 %v338, %v337
        %vm347 = vcmask 523264
        %v349 = vsel %vm347, %v299, 0
        %v352 = vsel %vm347, %v300, 0
        %v355 = vsel %vm347, %v301, 0
        %v358 = vsel %vm347, %v302, 0
        %v361 = vsel %vm347, %v303, 0
        %v364 = vsel %vm347, %v304, 0
        %v367 = vsel %vm347, %v305, 0
        %v370 = vsel %vm347, %v306, 0
        %v373 = vsel %vm347, %v339, 0
        %v376 = vsel %vm347, %v340, 0
        %v379 = vsel %vm347, %v341, 0
        %v382 = vsel %vm347, %v342, 0
        %v385 = vsel %vm347, %v343, 0
        %v388 = vsel %vm347, %v344, 0
        %v391 = vsel %vm347, %v345, 0
        %v394 = vsel %vm347, %v346, 0
        %396 = vmatpush.bf16.xpose.msra.mxu0 %v394
        %397 = vmatpush.bf16.xpose.msra.mxu0 %v391
        %398 = vmatpush.bf16.xpose.msra.mxu0 %v388
        %399 = vmatpush.bf16.xpose.msra.mxu0 %v385
        %400 = vmatpush.bf16.xpose.msra.mxu0 %v382
        %401 = vmatpush.bf16.xpose.msra.mxu0 %v379
        %402 = vmatpush.bf16.xpose.msra.mxu0 %v376
        %403 = vmatpush.bf16.xpose.msra.mxu0 %v373
        %404 = vmatmul.bf16.gmra.mxu0 %v349
        %v405 = vpop.f32.mrf.mxu0
        %v406 = vadd.f32 0.0, %v405
        %v407 = vpop.f32.mrf.mxu0
        %v408 = vadd.f32 0.0, %v407
        %409 = vmatmul.bf16.gmra.mxu0 %v352
        %v410 = vpop.f32.mrf.mxu0
        %v411 = vadd.f32 0.0, %v410
        %v412 = vpop.f32.mrf.mxu0
        %v413 = vadd.f32 0.0, %v412
        %414 = vmatmul.bf16.gmra.mxu0 %v355
        %v415 = vpop.f32.mrf.mxu0
        %v416 = vadd.f32 0.0, %v415
        %v417 = vpop.f32.mrf.mxu0
        %v418 = vadd.f32 0.0, %v417
        %419 = vmatmul.bf16.gmra.mxu0 %v358
        %v420 = vpop.f32.mrf.mxu0
        %v421 = vadd.f32 0.0, %v420
        %v422 = vpop.f32.mrf.mxu0
        %v423 = vadd.f32 0.0, %v422
        %424 = vmatmul.bf16.gmra.mxu0 %v361
        %v425 = vpop.f32.mrf.mxu0
        %v426 = vadd.f32 0.0, %v425
        %v427 = vpop.f32.mrf.mxu0
        %v428 = vadd.f32 0.0, %v427
        %429 = vmatmul.bf16.gmra.mxu0 %v364
        %v430 = vpop.f32.mrf.mxu0
        %v431 = vadd.f32 0.0, %v430
        %v432 = vpop.f32.mrf.mxu0
        %v433 = vadd.f32 0.0, %v432
        %434 = vmatmul.bf16.gmra.mxu0 %v367
        %v435 = vpop.f32.mrf.mxu0
        %v436 = vadd.f32 0.0, %v435
        %v437 = vpop.f32.mrf.mxu0
        %v438 = vadd.f32 0.0, %v437
        %439 = vmatmul.bf16.gmra.mxu0 %v370
        %v440 = vpop.f32.mrf.mxu0
        %v441 = vadd.f32 0.0, %v440
        %v442 = vpop.f32.mrf.mxu0
        %v443 = vadd.f32 0.0, %v442
        %444 = vdwg.mxu0
        %v445 = vmul.f32 %v406, 20.0
        %v446 = vmul.f32 %v408, 20.0
        %v447 = vmul.f32 %v411, 20.0
        %v448 = vmul.f32 %v413, 20.0
        %v449 = vmul.f32 %v416, 20.0
        %v450 = vmul.f32 %v418, 20.0
        %v451 = vmul.f32 %v421, 20.0
        %v452 = vmul.f32 %v423, 20.0
        %v453 = vmul.f32 %v426, 20.0
        %v454 = vmul.f32 %v428, 20.0
        %v455 = vmul.f32 %v431, 20.0
        %v456 = vmul.f32 %v433, 20.0
        %v457 = vmul.f32 %v436, 20.0
        %v458 = vmul.f32 %v438, 20.0
        %v459 = vmul.f32 %v441, 20.0
        %v460 = vmul.f32 %v443, 20.0
        %s461 = scalar_lea.vmem [#allocation2], %s224
        %462 = vst [vmem:[%s461] sm:$0xff] %v445
        %463 = vst [vmem:[%s461 + $0x8] sm:$0xff] %v446
        %464 = vst [vmem:[%s461 + $0x10] sm:$0xff] %v447
        %465 = vst [vmem:[%s461 + $0x18] sm:$0xff] %v448
        %466 = vst [vmem:[%s461 + $0x20] sm:$0xff] %v449
        %467 = vst [vmem:[%s461 + $0x28] sm:$0xff] %v450
        %468 = vst [vmem:[%s461 + $0x30] sm:$0xff] %v451
        %469 = vst [vmem:[%s461 + $0x38] sm:$0xff] %v452
        %470 = vst [vmem:[%s461 + $0x40] sm:$0xff] %v453
        %471 = vst [vmem:[%s461 + $0x48] sm:$0xff] %v454
        %472 = vst [vmem:[%s461 + $0x50] sm:$0xff] %v455
        %473 = vst [vmem:[%s461 + $0x58] sm:$0xff] %v456
        %474 = vst [vmem:[%s461 + $0x60] sm:$0xff] %v457
        %475 = vst [vmem:[%s461 + $0x68] sm:$0xff] %v458
        %476 = vst [vmem:[%s461 + $0x70] sm:$0xff] %v459
        %477 = vst [vmem:[%s461 + $0x78] sm:$0xff] %v460
        %v478 = vld [vmem:[%s223] sm:$0x1]
        %s479 = scalar_lea.vmem %s2, %s224
        %v480 = vld [vmem:[%s479] sm:$0xff]
        %v481 = vld [vmem:[%s479 + $0x8] sm:$0xff]
        %v482 = vld [vmem:[%s479 + $0x10] sm:$0xff]
        %v483 = vld [vmem:[%s479 + $0x18] sm:$0xff]
        %v484 = vld [vmem:[%s479 + $0x20] sm:$0xff]
        %v485 = vld [vmem:[%s479 + $0x28] sm:$0xff]
        %v486 = vld [vmem:[%s479 + $0x30] sm:$0xff]
        %v487 = vld [vmem:[%s479 + $0x38] sm:$0xff]
        %v488 = vld [vmem:[%s479 + $0x40] sm:$0xff]
        %v489 = vld [vmem:[%s479 + $0x48] sm:$0xff]
        %v490 = vld [vmem:[%s479 + $0x50] sm:$0xff]
        %v491 = vld [vmem:[%s479 + $0x58] sm:$0xff]
        %v492 = vld [vmem:[%s479 + $0x60] sm:$0xff]
        %v493 = vld [vmem:[%s479 + $0x68] sm:$0xff]
        %v494 = vld [vmem:[%s479 + $0x70] sm:$0xff]
        %v495 = vld [vmem:[%s479 + $0x78] sm:$0xff]
        %v496 = vlaneseq
        %v497 = vshrl.u32 %v496, 7
        %v498 = vadd.s32 %v497, 8
        %v499 = vadd.s32 %v497, 16
        %v500 = vadd.s32 %v497, 24
        %v501 = vadd.s32 %v497, 32
        %v502 = vadd.s32 %v497, 40
        %v503 = vadd.s32 %v497, 48
        %v504 = vadd.s32 %v497, 56
        %v505 = vadd.s32 %v497, 64
        %v506 = vadd.s32 %v497, 72
        %v507 = vadd.s32 %v497, 80
        %v508 = vadd.s32 %v497, 88
        %v509 = vadd.s32 %v497, 96
        %v510 = vadd.s32 %v497, 104
        %v511 = vadd.s32 %v497, 112
        %v512 = vadd.s32 %v497, 120
        %v513 = vstv %s224
        %v514 = vadd.s32 %v513, %v497
        %v515 = vadd.s32 %v513, %v498
        %v516 = vadd.s32 %v513, %v499
        %v517 = vadd.s32 %v513, %v500
        %v518 = vadd.s32 %v513, %v501
        %v519 = vadd.s32 %v513, %v502
        %v520 = vadd.s32 %v513, %v503
        %v521 = vadd.s32 %v513, %v504
        %v522 = vadd.s32 %v513, %v505
        %v523 = vadd.s32 %v513, %v506
        %v524 = vadd.s32 %v513, %v507
        %v525 = vadd.s32 %v513, %v508
        %v526 = vadd.s32 %v513, %v509
        %v527 = vadd.s32 %v513, %v510
        %v528 = vadd.s32 %v513, %v511
        %v529 = vadd.s32 %v513, %v512
        %530 = vset.pattern.permute.xlu0 0
        %531 = vperm.xlu0 %530, %v480
        %v532 = vpop.permute.xlu0 %531
        %533 = vset.pattern.permute.xlu0 0
        %534 = vperm.xlu0 %533, %v481
        %v535 = vpop.permute.xlu0 %534
        %536 = vset.pattern.permute.xlu0 0
        %537 = vperm.xlu0 %536, %v482
        %v538 = vpop.permute.xlu0 %537
        %539 = vset.pattern.permute.xlu0 0
        %540 = vperm.xlu0 %539, %v483
        %v541 = vpop.permute.xlu0 %540
        %542 = vset.pattern.permute.xlu0 0
        %543 = vperm.xlu0 %542, %v484
        %v544 = vpop.permute.xlu0 %543
        %545 = vset.pattern.permute.xlu0 0
        %546 = vperm.xlu0 %545, %v485
        %v547 = vpop.permute.xlu0 %546
        %548 = vset.pattern.permute.xlu0 0
        %549 = vperm.xlu0 %548, %v486
        %v550 = vpop.permute.xlu0 %549
        %551 = vset.pattern.permute.xlu0 0
        %552 = vperm.xlu0 %551, %v487
        %v553 = vpop.permute.xlu0 %552
        %554 = vset.pattern.permute.xlu0 0
        %555 = vperm.xlu0 %554, %v488
        %v556 = vpop.permute.xlu0 %555
        %557 = vset.pattern.permute.xlu0 0
        %558 = vperm.xlu0 %557, %v489
        %v559 = vpop.permute.xlu0 %558
        %560 = vset.pattern.permute.xlu0 0
        %561 = vperm.xlu0 %560, %v490
        %v562 = vpop.permute.xlu0 %561
        %563 = vset.pattern.permute.xlu0 0
        %564 = vperm.xlu0 %563, %v491
        %v565 = vpop.permute.xlu0 %564
        %566 = vset.pattern.permute.xlu0 0
        %567 = vperm.xlu0 %566, %v492
        %v568 = vpop.permute.xlu0 %567
        %569 = vset.pattern.permute.xlu0 0
        %570 = vperm.xlu0 %569, %v493
        %v571 = vpop.permute.xlu0 %570
        %572 = vset.pattern.permute.xlu0 0
        %573 = vperm.xlu0 %572, %v494
        %v574 = vpop.permute.xlu0 %573
        %575 = vset.pattern.permute.xlu0 0
        %576 = vperm.xlu0 %575, %v495
        %v577 = vpop.permute.xlu0 %576
        %v578 = vperm.slane %v478, 0
        %vm579 = vcmp.ne.s32.totalorder %v532, %v578
        %vm580 = vcmp.ne.s32.totalorder %v535, %v578
        %vm581 = vcmp.ne.s32.totalorder %v538, %v578
        %vm582 = vcmp.ne.s32.totalorder %v541, %v578
        %vm583 = vcmp.ne.s32.totalorder %v544, %v578
        %vm584 = vcmp.ne.s32.totalorder %v547, %v578
        %vm585 = vcmp.ne.s32.totalorder %v550, %v578
        %vm586 = vcmp.ne.s32.totalorder %v553, %v578
        %vm587 = vcmp.ne.s32.totalorder %v556, %v578
        %vm588 = vcmp.ne.s32.totalorder %v559, %v578
        %vm589 = vcmp.ne.s32.totalorder %v562, %v578
        %vm590 = vcmp.ne.s32.totalorder %v565, %v578
        %vm591 = vcmp.ne.s32.totalorder %v568, %v578
        %vm592 = vcmp.ne.s32.totalorder %v571, %v578
        %vm593 = vcmp.ne.s32.totalorder %v574, %v578
        %vm594 = vcmp.ne.s32.totalorder %v577, %v578
        %vm595 = vcmp.lt.s32.totalorder %v514, 200
        %vm596 = vcmp.lt.s32.totalorder %v515, 200
        %vm597 = vcmp.lt.s32.totalorder %v516, 200
        %vm598 = vcmp.lt.s32.totalorder %v517, 200
        %vm599 = vcmp.lt.s32.totalorder %v518, 200
        %vm600 = vcmp.lt.s32.totalorder %v519, 200
        %vm601 = vcmp.lt.s32.totalorder %v520, 200
        %vm602 = vcmp.lt.s32.totalorder %v521, 200
        %vm603 = vcmp.lt.s32.totalorder %v522, 200
        %vm604 = vcmp.lt.s32.totalorder %v523, 200
        %vm605 = vcmp.lt.s32.totalorder %v524, 200
        %vm606 = vcmp.lt.s32.totalorder %v525, 200
        %vm607 = vcmp.lt.s32.totalorder %v526, 200
        %vm608 = vcmp.lt.s32.totalorder %v527, 200
        %vm609 = vcmp.lt.s32.totalorder %v528, 200
        %vm610 = vcmp.lt.s32.totalorder %v529, 200
        %v611 = vsel %vm595, 1, 0
        %v612 = vsel %vm596, 1, 0
        %v613 = vsel %vm597, 1, 0
        %v614 = vsel %vm598, 1, 0
        %v615 = vsel %vm599, 1, 0
        %v616 = vsel %vm600, 1, 0
        %v617 = vsel %vm601, 1, 0
        %v618 = vsel %vm602, 1, 0
        %v619 = vsel %vm603, 1, 0
        %v620 = vsel %vm604, 1, 0
        %v621 = vsel %vm605, 1, 0
        %v622 = vsel %vm606, 1, 0
        %v623 = vsel %vm607, 1, 0
        %v624 = vsel %vm608, 1, 0
        %v625 = vsel %vm609, 1, 0
        %v626 = vsel %vm610, 1, 0
        %vm627 = vcmp.eq.s32.totalorder %v611, 1
        %vm628 = vcmp.eq.s32.totalorder %v612, 1
        %vm629 = vcmp.eq.s32.totalorder %v613, 1
        %vm630 = vcmp.eq.s32.totalorder %v614, 1
        %vm631 = vcmp.eq.s32.totalorder %v615, 1
        %vm632 = vcmp.eq.s32.totalorder %v616, 1
        %vm633 = vcmp.eq.s32.totalorder %v617, 1
        %vm634 = vcmp.eq.s32.totalorder %v618, 1
        %vm635 = vcmp.eq.s32.totalorder %v619, 1
        %vm636 = vcmp.eq.s32.totalorder %v620, 1
        %vm637 = vcmp.eq.s32.totalorder %v621, 1
        %vm638 = vcmp.eq.s32.totalorder %v622, 1
        %vm639 = vcmp.eq.s32.totalorder %v623, 1
        %vm640 = vcmp.eq.s32.totalorder %v624, 1
        %vm641 = vcmp.eq.s32.totalorder %v625, 1
        %vm642 = vcmp.eq.s32.totalorder %v626, 1
        %vm643 = vmand %vm579, %vm627
        %vm644 = vmand %vm580, %vm628
        %vm645 = vmand %vm581, %vm629
        %vm646 = vmand %vm582, %vm630
        %vm647 = vmand %vm583, %vm631
        %vm648 = vmand %vm584, %vm632
        %vm649 = vmand %vm585, %vm633
        %vm650 = vmand %vm586, %vm634
        %vm651 = vmand %vm587, %vm635
        %vm652 = vmand %vm588, %vm636
        %vm653 = vmand %vm589, %vm637
        %vm654 = vmand %vm590, %vm638
        %vm655 = vmand %vm591, %vm639
        %vm656 = vmand %vm592, %vm640
        %vm657 = vmand %vm593, %vm641
        %vm658 = vmand %vm594, %vm642
        %v659 = vsel %vm643, %v445, -1e+30
        %v660 = vsel %vm644, %v446, -1e+30
        %v661 = vsel %vm645, %v447, -1e+30
        %v662 = vsel %vm646, %v448, -1e+30
        %v663 = vsel %vm647, %v449, -1e+30
        %v664 = vsel %vm648, %v450, -1e+30
        %v665 = vsel %vm649, %v451, -1e+30
        %v666 = vsel %vm650, %v452, -1e+30
        %v667 = vsel %vm651, %v453, -1e+30
        %v668 = vsel %vm652, %v454, -1e+30
        %v669 = vsel %vm653, %v455, -1e+30
        %v670 = vsel %vm654, %v456, -1e+30
        %v671 = vsel %vm655, %v457, -1e+30
        %v672 = vsel %vm656, %v458, -1e+30
        %v673 = vsel %vm657, %v459, -1e+30
        %v674 = vsel %vm658, %v460, -1e+30
        %v675 = vmax.f32 %v659, %v663
        %v676 = vmax.f32 %v660, %v664
        %v677 = vmax.f32 %v661, %v665
        %v678 = vmax.f32 %v662, %v666
        %v679 = vmax.f32 %v675, %v667
        %v680 = vmax.f32 %v676, %v668
        %v681 = vmax.f32 %v677, %v669
        %v682 = vmax.f32 %v678, %v670
        %v683 = vmax.f32 %v679, %v671
        %v684 = vmax.f32 %v680, %v672
        %v685 = vmax.f32 %v681, %v673
        %v686 = vmax.f32 %v682, %v674
        %v687 = vmax.f32 %v683, %v684
        %v688 = vmax.f32 %v685, %v686
        %v689 = vmax.f32 %v687, %v688
        %v690 = vrot.slane %v689, 4
        %v691 = vmax.f32 %v689, %v690
        %v692 = vrot.slane %v691, 2
        %v693 = vmax.f32 %v691, %v692
        %v694 = vrot.slane %v693, 1
        %v695 = vmax.f32 %v693, %v694
        %v696 = vld [vmem:[#allocation3] sm:$0x1]
        %v697 = vmax.f32 %v696, %v695
        %v699 = vperm.slane %v697, 0
        %v701 = vsub.f32 %v659, %v699
        %v702 = vsub.f32 %v660, %v699
        %v703 = vsub.f32 %v661, %v699
        %v704 = vsub.f32 %v662, %v699
        %v705 = vsub.f32 %v663, %v699
        %v706 = vsub.f32 %v664, %v699
        %v707 = vsub.f32 %v665, %v699
        %v708 = vsub.f32 %v666, %v699
        %v709 = vsub.f32 %v667, %v699
        %v710 = vsub.f32 %v668, %v699
        %v711 = vsub.f32 %v669, %v699
        %v712 = vsub.f32 %v670, %v699
        %v713 = vsub.f32 %v671, %v699
        %v714 = vsub.f32 %v672, %v699
        %v715 = vsub.f32 %v673, %v699
        %v716 = vsub.f32 %v674, %v699
        %v717 = vmul.f32 %v701, 1.442695
        %v718 = vpow.pop %v717
        %v719 = vmul.f32 %v702, 1.442695
        %v720 = vpow.pop %v719
        %v721 = vmul.f32 %v703, 1.442695
        %v722 = vpow.pop %v721
        %v723 = vmul.f32 %v704, 1.442695
        %v724 = vpow.pop %v723
        %v725 = vmul.f32 %v705, 1.442695
        %v726 = vpow.pop %v725
        %v727 = vmul.f32 %v706, 1.442695
        %v728 = vpow.pop %v727
        %v729 = vmul.f32 %v707, 1.442695
        %v730 = vpow.pop %v729
        %v731 = vmul.f32 %v708, 1.442695
        %v732 = vpow.pop %v731
        %v733 = vmul.f32 %v709, 1.442695
        %v734 = vpow.pop %v733
        %v735 = vmul.f32 %v710, 1.442695
        %v736 = vpow.pop %v735
        %v737 = vmul.f32 %v711, 1.442695
        %v738 = vpow.pop %v737
        %v739 = vmul.f32 %v712, 1.442695
        %v740 = vpow.pop %v739
        %v741 = vmul.f32 %v713, 1.442695
        %v742 = vpow.pop %v741
        %v743 = vmul.f32 %v714, 1.442695
        %v744 = vpow.pop %v743
        %v745 = vmul.f32 %v715, 1.442695
        %v746 = vpow.pop %v745
        %v747 = vmul.f32 %v716, 1.442695
        %v748 = vpow.pop %v747
        %v749 = vsel %vm643, %v718, 0.0
        %v750 = vsel %vm644, %v720, 0.0
        %v751 = vsel %vm645, %v722, 0.0
        %v752 = vsel %vm646, %v724, 0.0
        %v753 = vsel %vm647, %v726, 0.0
        %v754 = vsel %vm648, %v728, 0.0
        %v755 = vsel %vm649, %v730, 0.0
        %v756 = vsel %vm650, %v732, 0.0
        %v757 = vsel %vm651, %v734, 0.0
        %v758 = vsel %vm652, %v736, 0.0
        %v759 = vsel %vm653, %v738, 0.0
        %v760 = vsel %vm654, %v740, 0.0
        %v761 = vsel %vm655, %v742, 0.0
        %v762 = vsel %vm656, %v744, 0.0
        %v763 = vsel %vm657, %v746, 0.0
        %v764 = vsel %vm658, %v748, 0.0
        %v765 = vld [vmem:[#allocation4] sm:$0x1]
        %v766 = vsub.f32 %v696, %v697
        %v767 = vmul.f32 %v766, 1.442695
        %v768 = vpow.pop %v767
        %v769 = vmul.f32 %v765, %v768
        %v770 = vadd.f32 %v749, %v750
        %v771 = vadd.f32 %v770, %v751
        %v772 = vadd.f32 %v771, %v752
        %v773 = vadd.f32 %v772, %v753
        %v774 = vadd.f32 %v773, %v754
        %v775 = vadd.f32 %v774, %v755
        %v776 = vadd.f32 %v775, %v756
        %v777 = vadd.f32 %v776, %v757
        %v778 = vadd.f32 %v777, %v758
        %v779 = vadd.f32 %v778, %v759
        %v780 = vadd.f32 %v779, %v760
        %v781 = vadd.f32 %v780, %v761
        %v782 = vadd.f32 %v781, %v762
        %v783 = vadd.f32 %v782, %v763
        %v784 = vadd.f32 %v783, %v764
        %v785 = vrot.slane %v784, 4
        %v786 = vadd.f32 %v784, %v785
        %v787 = vrot.slane %v786, 2
        %v788 = vadd.f32 %v786, %v787
        %v789 = vrot.slane %v788, 1
        %v790 = vadd.f32 %v788, %v789
        %v791 = vadd.f32 %v769, %v790
        %792 = vst [vmem:[#allocation4] sm:$0x1] %v791
        %793 = vst [vmem:[#allocation3] sm:$0x1] %v697
        %p794 = scmp.eq.s32.totalorder %s23, 1
        // Predicated region
        $region41: #{tpu_custom_call.1} parent=35 // pred_check
          %p795 = pneg %p794
        $region42: #{tpu_custom_call.1} parent=35 // pred_check_branch
          %797 = sbr.rel (%p795) target = $region44
        $region43: #{tpu_custom_call.1} parent=35 // pred_region
          %v798 = vld [vmem:[#allocation2] sm:$0xff]
          %v799 = vld [vmem:[#allocation2 + $0x8] sm:$0xff]
          %v800 = vld [vmem:[#allocation2 + $0x10] sm:$0xff]
          %v801 = vld [vmem:[#allocation2 + $0x18] sm:$0xff]
          %v802 = vld [vmem:[#allocation2 + $0x20] sm:$0xff]
          %v803 = vld [vmem:[#allocation2 + $0x28] sm:$0xff]
          %v804 = vld [vmem:[#allocation2 + $0x30] sm:$0xff]
          %v805 = vld [vmem:[#allocation2 + $0x38] sm:$0xff]
          %v806 = vld [vmem:[#allocation2 + $0x40] sm:$0xff]
          %v807 = vld [vmem:[#allocation2 + $0x48] sm:$0xff]
          %v808 = vld [vmem:[#allocation2 + $0x50] sm:$0xff]
          %v809 = vld [vmem:[#allocation2 + $0x58] sm:$0xff]
          %v810 = vld [vmem:[#allocation2 + $0x60] sm:$0xff]
          %v811 = vld [vmem:[#allocation2 + $0x68] sm:$0xff]
          %v812 = vld [vmem:[#allocation2 + $0x70] sm:$0xff]
          %v813 = vld [vmem:[#allocation2 + $0x78] sm:$0xff]
          %v814 = vld [vmem:[#allocation2 + $0x80] sm:$0xff]
          %v815 = vld [vmem:[#allocation2 + $0x88] sm:$0xff]
          %v816 = vld [vmem:[#allocation2 + $0x90] sm:$0xff]
          %v817 = vld [vmem:[#allocation2 + $0x98] sm:$0xff]
          %v818 = vld [vmem:[#allocation2 + $0xa0] sm:$0xff]
          %v819 = vld [vmem:[#allocation2 + $0xa8] sm:$0xff]
          %v820 = vld [vmem:[#allocation2 + $0xb0] sm:$0xff]
          %v821 = vld [vmem:[#allocation2 + $0xb8] sm:$0xff]
          %v822 = vld [vmem:[#allocation2 + $0xc0] sm:$0xff]
          %v823 = vld [vmem:[#allocation2 + $0xc8] sm:$0xff]
          %v824 = vld [vmem:[#allocation2 + $0xd0] sm:$0xff]
          %v825 = vld [vmem:[#allocation2 + $0xd8] sm:$0xff]
          %v826 = vld [vmem:[#allocation2 + $0xe0] sm:$0xff]
          %v827 = vld [vmem:[#allocation2 + $0xe8] sm:$0xff]
          %v828 = vld [vmem:[#allocation2 + $0xf0] sm:$0xff]
          %v829 = vld [vmem:[#allocation2 + $0xf8] sm:$0xff]
          %v830 = vld [vmem:[%s2] sm:$0xff]
          %v831 = vld [vmem:[%s2 + $0x8] sm:$0xff]
          %v832 = vld [vmem:[%s2 + $0x10] sm:$0xff]
          %v833 = vld [vmem:[%s2 + $0x18] sm:$0xff]
          %v834 = vld [vmem:[%s2 + $0x20] sm:$0xff]
          %v835 = vld [vmem:[%s2 + $0x28] sm:$0xff]
          %v836 = vld [vmem:[%s2 + $0x30] sm:$0xff]
          %v837 = vld [vmem:[%s2 + $0x38] sm:$0xff]
          %v838 = vld [vmem:[%s2 + $0x40] sm:$0xff]
          %v839 = vld [vmem:[%s2 + $0x48] sm:$0xff]
          %v840 = vld [vmem:[%s2 + $0x50] sm:$0xff]
          %v841 = vld [vmem:[%s2 + $0x58] sm:$0xff]
          %v842 = vld [vmem:[%s2 + $0x60] sm:$0xff]
          %v843 = vld [vmem:[%s2 + $0x68] sm:$0xff]
          %v844 = vld [vmem:[%s2 + $0x70] sm:$0xff]
          %v845 = vld [vmem:[%s2 + $0x78] sm:$0xff]
          %v846 = vld [vmem:[%s2 + $0x80] sm:$0xff]
          %v847 = vld [vmem:[%s2 + $0x88] sm:$0xff]
          %v848 = vld [vmem:[%s2 + $0x90] sm:$0xff]
          %v849 = vld [vmem:[%s2 + $0x98] sm:$0xff]
          %v850 = vld [vmem:[%s2 + $0xa0] sm:$0xff]
          %v851 = vld [vmem:[%s2 + $0xa8] sm:$0xff]
          %v852 = vld [vmem:[%s2 + $0xb0] sm:$0xff]
          %v853 = vld [vmem:[%s2 + $0xb8] sm:$0xff]
          %v854 = vld [vmem:[%s2 + $0xc0] sm:$0xff]
          %v855 = vld [vmem:[%s2 + $0xc8] sm:$0xff]
          %v856 = vld [vmem:[%s2 + $0xd0] sm:$0xff]
          %v857 = vld [vmem:[%s2 + $0xd8] sm:$0xff]
          %v858 = vld [vmem:[%s2 + $0xe0] sm:$0xff]
          %v859 = vld [vmem:[%s2 + $0xe8] sm:$0xff]
          %v860 = vld [vmem:[%s2 + $0xf0] sm:$0xff]
          %v861 = vld [vmem:[%s2 + $0xf8] sm:$0xff]
          %862 = vset.pattern.permute.xlu0 0
          %863 = vperm.xlu0 %862, %v830
          %v864 = vpop.permute.xlu0 %863
          %865 = vset.pattern.permute.xlu0 0
          %866 = vperm.xlu0 %865, %v831
          %v867 = vpop.permute.xlu0 %866
          %868 = vset.pattern.permute.xlu0 0
          %869 = vperm.xlu0 %868, %v832
          %v870 = vpop.permute.xlu0 %869
          %871 = vset.pattern.permute.xlu0 0
          %872 = vperm.xlu0 %871, %v833
          %v873 = vpop.permute.xlu0 %872
          %874 = vset.pattern.permute.xlu0 0
          %875 = vperm.xlu0 %874, %v834
          %v876 = vpop.permute.xlu0 %875
          %877 = vset.pattern.permute.xlu0 0
          %878 = vperm.xlu0 %877, %v835
          %v879 = vpop.permute.xlu0 %878
          %880 = vset.pattern.permute.xlu0 0
          %881 = vperm.xlu0 %880, %v836
          %v882 = vpop.permute.xlu0 %881
          %883 = vset.pattern.permute.xlu0 0
          %884 = vperm.xlu0 %883, %v837
          %v885 = vpop.permute.xlu0 %884
          %886 = vset.pattern.permute.xlu0 0
          %887 = vperm.xlu0 %886, %v838
          %v888 = vpop.permute.xlu0 %887
          %889 = vset.pattern.permute.xlu0 0
          %890 = vperm.xlu0 %889, %v839
          %v891 = vpop.permute.xlu0 %890
          %892 = vset.pattern.permute.xlu0 0
          %893 = vperm.xlu0 %892, %v840
          %v894 = vpop.permute.xlu0 %893
          %895 = vset.pattern.permute.xlu0 0
          %896 = vperm.xlu0 %895, %v841
          %v897 = vpop.permute.xlu0 %896
          %898 = vset.pattern.permute.xlu0 0
          %899 = vperm.xlu0 %898, %v842
          %v900 = vpop.permute.xlu0 %899
          %901 = vset.pattern.permute.xlu0 0
          %902 = vperm.xlu0 %901, %v843
          %v903 = vpop.permute.xlu0 %902
          %904 = vset.pattern.permute.xlu0 0
          %905 = vperm.xlu0 %904, %v844
          %v906 = vpop.permute.xlu0 %905
          %907 = vset.pattern.permute.xlu0 0
          %908 = vperm.xlu0 %907, %v845
          %v909 = vpop.permute.xlu0 %908
          %910 = vset.pattern.permute.xlu0 0
          %911 = vperm.xlu0 %910, %v846
          %v912 = vpop.permute.xlu0 %911
          %913 = vset.pattern.permute.xlu0 0
          %914 = vperm.xlu0 %913, %v847
          %v915 = vpop.permute.xlu0 %914
          %916 = vset.pattern.permute.xlu0 0
          %917 = vperm.xlu0 %916, %v848
          %v918 = vpop.permute.xlu0 %917
          %919 = vset.pattern.permute.xlu0 0
          %920 = vperm.xlu0 %919, %v849
          %v921 = vpop.permute.xlu0 %920
          %922 = vset.pattern.permute.xlu0 0
          %923 = vperm.xlu0 %922, %v850
          %v924 = vpop.permute.xlu0 %923
          %925 = vset.pattern.permute.xlu0 0
          %926 = vperm.xlu0 %925, %v851
          %v927 = vpop.permute.xlu0 %926
          %928 = vset.pattern.permute.xlu0 0
          %929 = vperm.xlu0 %928, %v852
          %v930 = vpop.permute.xlu0 %929
          %931 = vset.pattern.permute.xlu0 0
          %932 = vperm.xlu0 %931, %v853
          %v933 = vpop.permute.xlu0 %932
          %934 = vset.pattern.permute.xlu0 0
          %935 = vperm.xlu0 %934, %v854
          %v936 = vpop.permute.xlu0 %935
          %937 = vset.pattern.permute.xlu0 0
          %938 = vperm.xlu0 %937, %v855
          %v939 = vpop.permute.xlu0 %938
          %940 = vset.pattern.permute.xlu0 0
          %941 = vperm.xlu0 %940, %v856
          %v942 = vpop.permute.xlu0 %941
          %943 = vset.pattern.permute.xlu0 0
          %944 = vperm.xlu0 %943, %v857
          %v945 = vpop.permute.xlu0 %944
          %946 = vset.pattern.permute.xlu0 0
          %947 = vperm.xlu0 %946, %v858
          %v948 = vpop.permute.xlu0 %947
          %949 = vset.pattern.permute.xlu0 0
          %950 = vperm.xlu0 %949, %v859
          %v951 = vpop.permute.xlu0 %950
          %952 = vset.pattern.permute.xlu0 0
          %953 = vperm.xlu0 %952, %v860
          %v954 = vpop.permute.xlu0 %953
          %955 = vset.pattern.permute.xlu0 0
          %956 = vperm.xlu0 %955, %v861
          %v957 = vpop.permute.xlu0 %956
          %vm958 = vcmp.eq.s32.totalorder %v864, %v578
          %vm959 = vcmp.eq.s32.totalorder %v867, %v578
          %vm960 = vcmp.eq.s32.totalorder %v870, %v578
          %vm961 = vcmp.eq.s32.totalorder %v873, %v578
          %vm962 = vcmp.eq.s32.totalorder %v876, %v578
          %vm963 = vcmp.eq.s32.totalorder %v879, %v578
          %vm964 = vcmp.eq.s32.totalorder %v882, %v578
          %vm965 = vcmp.eq.s32.totalorder %v885, %v578
          %vm966 = vcmp.eq.s32.totalorder %v888, %v578
          %vm967 = vcmp.eq.s32.totalorder %v891, %v578
          %vm968 = vcmp.eq.s32.totalorder %v894, %v578
          %vm969 = vcmp.eq.s32.totalorder %v897, %v578
          %vm970 = vcmp.eq.s32.totalorder %v900, %v578
          %vm971 = vcmp.eq.s32.totalorder %v903, %v578
          %vm972 = vcmp.eq.s32.totalorder %v906, %v578
          %vm973 = vcmp.eq.s32.totalorder %v909, %v578
          %vm974 = vcmp.eq.s32.totalorder %v912, %v578
          %vm975 = vcmp.eq.s32.totalorder %v915, %v578
          %vm976 = vcmp.eq.s32.totalorder %v918, %v578
          %vm977 = vcmp.eq.s32.totalorder %v921, %v578
          %vm978 = vcmp.eq.s32.totalorder %v924, %v578
          %vm979 = vcmp.eq.s32.totalorder %v927, %v578
          %vm980 = vcmp.eq.s32.totalorder %v930, %v578
          %vm981 = vcmp.eq.s32.totalorder %v933, %v578
          %vm982 = vcmp.eq.s32.totalorder %v936, %v578
          %vm983 = vcmp.eq.s32.totalorder %v939, %v578
          %vm984 = vcmp.eq.s32.totalorder %v942, %v578
          %vm985 = vcmp.eq.s32.totalorder %v945, %v578
          %vm986 = vcmp.eq.s32.totalorder %v948, %v578
          %vm987 = vcmp.eq.s32.totalorder %v951, %v578
          %vm988 = vcmp.eq.s32.totalorder %v954, %v578
          %vm989 = vcmp.eq.s32.totalorder %v957, %v578
          %v990 = vld [vmem:[#allocation3] sm:$0x1]
          %v991 = vld [vmem:[#allocation4] sm:$0x1]
          %v992 = vlog2.pop %v991
          %v993 = vmul.f32 %v992, 0.6931472
          %v994 = vadd.f32 %v990, %v993
          %v996 = vperm.slane %v994, 0
          %v998 = vsub.f32 %v996, %v798
          %v999 = vsub.f32 %v996, %v799
          %v1000 = vsub.f32 %v996, %v800
          %v1001 = vsub.f32 %v996, %v801
          %v1002 = vsub.f32 %v996, %v802
          %v1003 = vsub.f32 %v996, %v803
          %v1004 = vsub.f32 %v996, %v804
          %v1005 = vsub.f32 %v996, %v805
          %v1006 = vsub.f32 %v996, %v806
          %v1007 = vsub.f32 %v996, %v807
          %v1008 = vsub.f32 %v996, %v808
          %v1009 = vsub.f32 %v996, %v809
          %v1010 = vsub.f32 %v996, %v810
          %v1011 = vsub.f32 %v996, %v811
          %v1012 = vsub.f32 %v996, %v812
          %v1013 = vsub.f32 %v996, %v813
          %v1014 = vsub.f32 %v996, %v814
          %v1015 = vsub.f32 %v996, %v815
          %v1016 = vsub.f32 %v996, %v816
          %v1017 = vsub.f32 %v996, %v817
          %v1018 = vsub.f32 %v996, %v818
          %v1019 = vsub.f32 %v996, %v819
          %v1020 = vsub.f32 %v996, %v820
          %v1021 = vsub.f32 %v996, %v821
          %v1022 = vsub.f32 %v996, %v822
          %v1023 = vsub.f32 %v996, %v823
          %v1024 = vsub.f32 %v996, %v824
          %v1025 = vsub.f32 %v996, %v825
          %v1026 = vsub.f32 %v996, %v826
          %v1027 = vsub.f32 %v996, %v827
          %v1028 = vsub.f32 %v996, %v828
          %v1029 = vsub.f32 %v996, %v829
          %v1030 = vmax.f32 %v998, 0.0
          %v1031 = vmax.f32 %v999, 0.0
          %v1032 = vmax.f32 %v1000, 0.0
          %v1033 = vmax.f32 %v1001, 0.0
          %v1034 = vmax.f32 %v1002, 0.0
          %v1035 = vmax.f32 %v1003, 0.0
          %v1036 = vmax.f32 %v1004, 0.0
          %v1037 = vmax.f32 %v1005, 0.0
          %v1038 = vmax.f32 %v1006, 0.0
          %v1039 = vmax.f32 %v1007, 0.0
          %v1040 = vmax.f32 %v1008, 0.0
          %v1041 = vmax.f32 %v1009, 0.0
          %v1042 = vmax.f32 %v1010, 0.0
          %v1043 = vmax.f32 %v1011, 0.0
          %v1044 = vmax.f32 %v1012, 0.0
          %v1045 = vmax.f32 %v1013, 0.0
          %v1046 = vmax.f32 %v1014, 0.0
          %v1047 = vmax.f32 %v1015, 0.0
          %v1048 = vmax.f32 %v1016, 0.0
          %v1049 = vmax.f32 %v1017, 0.0
          %v1050 = vmax.f32 %v1018, 0.0
          %v1051 = vmax.f32 %v1019, 0.0
          %v1052 = vmax.f32 %v1020, 0.0
          %v1053 = vmax.f32 %v1021, 0.0
          %v1054 = vmax.f32 %v1022, 0.0
          %v1055 = vmax.f32 %v1023, 0.0
          %v1056 = vmax.f32 %v1024, 0.0
          %v1057 = vmax.f32 %v1025, 0.0
          %v1058 = vmax.f32 %v1026, 0.0
          %v1059 = vmax.f32 %v1027, 0.0
          %v1060 = vmax.f32 %v1028, 0.0
          %v1061 = vmax.f32 %v1029, 0.0
          %v1062 = vand.u32 2147483647, %v998
          %v1063 = vand.u32 2147483647, %v999
          %v1064 = vand.u32 2147483647, %v1000
          %v1065 = vand.u32 2147483647, %v1001
          %v1066 = vand.u32 2147483647, %v1002
          %v1067 = vand.u32 2147483647, %v1003
          %v1068 = vand.u32 2147483647, %v1004
          %v1069 = vand.u32 2147483647, %v1005
          %v1070 = vand.u32 2147483647, %v1006
          %v1071 = vand.u32 2147483647, %v1007
          %v1072 = vand.u32 2147483647, %v1008
          %v1073 = vand.u32 2147483647, %v1009
          %v1074 = vand.u32 2147483647, %v1010
          %v1075 = vand.u32 2147483647, %v1011
          %v1076 = vand.u32 2147483647, %v1012
          %v1077 = vand.u32 2147483647, %v1013
          %v1078 = vand.u32 2147483647, %v1014
          %v1079 = vand.u32 2147483647, %v1015
          %v1080 = vand.u32 2147483647, %v1016
          %v1081 = vand.u32 2147483647, %v1017
          %v1082 = vand.u32 2147483647, %v1018
          %v1083 = vand.u32 2147483647, %v1019
          %v1084 = vand.u32 2147483647, %v1020
          %v1085 = vand.u32 2147483647, %v1021
          %v1086 = vand.u32 2147483647, %v1022
          %v1087 = vand.u32 2147483647, %v1023
          %v1088 = vand.u32 2147483647, %v1024
          %v1089 = vand.u32 2147483647, %v1025
          %v1090 = vand.u32 2147483647, %v1026
          %v1091 = vand.u32 2147483647, %v1027
          %v1092 = vand.u32 2147483647, %v1028
          %v1093 = vand.u32 2147483647, %v1029
          %v1094 = vsub.f32 0.0, %v1062
          %v1095 = vsub.f32 0.0, %v1063
          %v1096 = vsub.f32 0.0, %v1064
          %v1097 = vsub.f32 0.0, %v1065
          %v1098 = vsub.f32 0.0, %v1066
          %v1099 = vsub.f32 0.0, %v1067
          %v1100 = vsub.f32 0.0, %v1068
          %v1101 = vsub.f32 0.0, %v1069
          %v1102 = vsub.f32 0.0, %v1070
          %v1103 = vsub.f32 0.0, %v1071
          %v1104 = vsub.f32 0.0, %v1072
          %v1105 = vsub.f32 0.0, %v1073
          %v1106 = vsub.f32 0.0, %v1074
          %v1107 = vsub.f32 0.0, %v1075
          %v1108 = vsub.f32 0.0, %v1076
          %v1109 = vsub.f32 0.0, %v1077
          %v1110 = vsub.f32 0.0, %v1078
          %v1111 = vsub.f32 0.0, %v1079
          %v1112 = vsub.f32 0.0, %v1080
          %v1113 = vsub.f32 0.0, %v1081
          %v1114 = vsub.f32 0.0, %v1082
          %v1115 = vsub.f32 0.0, %v1083
          %v1116 = vsub.f32 0.0, %v1084
          %v1117 = vsub.f32 0.0, %v1085
          %v1118 = vsub.f32 0.0, %v1086
          %v1119 = vsub.f32 0.0, %v1087
          %v1120 = vsub.f32 0.0, %v1088
          %v1121 = vsub.f32 0.0, %v1089
          %v1122 = vsub.f32 0.0, %v1090
          %v1123 = vsub.f32 0.0, %v1091
          %v1124 = vsub.f32 0.0, %v1092
          %v1125 = vsub.f32 0.0, %v1093
          %v1126 = vmul.f32 %v1094, 1.442695
          %v1127 = vpow.pop %v1126
          %v1128 = vmul.f32 %v1095, 1.442695
          %v1129 = vpow.pop %v1128
          %v1130 = vmul.f32 %v1096, 1.442695
          %v1131 = vpow.pop %v1130
          %v1132 = vmul.f32 %v1097, 1.442695
          %v1133 = vpow.pop %v1132
          %v1134 = vmul.f32 %v1098, 1.442695
          %v1135 = vpow.pop %v1134
          %v1136 = vmul.f32 %v1099, 1.442695
          %v1137 = vpow.pop %v1136
          %v1138 = vmul.f32 %v1100, 1.442695
          %v1139 = vpow.pop %v1138
          %v1140 = vmul.f32 %v1101, 1.442695
          %v1141 = vpow.pop %v1140
          %v1142 = vmul.f32 %v1102, 1.442695
          %v1143 = vpow.pop %v1142
          %v1144 = vmul.f32 %v1103, 1.442695
          %v1145 = vpow.pop %v1144
          %v1146 = vmul.f32 %v1104, 1.442695
          %v1147 = vpow.pop %v1146
          %v1148 = vmul.f32 %v1105, 1.442695
          %v1149 = vpow.pop %v1148
          %v1150 = vmul.f32 %v1106, 1.442695
          %v1151 = vpow.pop %v1150
          %v1152 = vmul.f32 %v1107, 1.442695
          %v1153 = vpow.pop %v1152
          %v1154 = vmul.f32 %v1108, 1.442695
          %v1155 = vpow.pop %v1154
          %v1156 = vmul.f32 %v1109, 1.442695
          %v1157 = vpow.pop %v1156
          %v1158 = vmul.f32 %v1110, 1.442695
          %v1159 = vpow.pop %v1158
          %v1160 = vmul.f32 %v1111, 1.442695
          %v1161 = vpow.pop %v1160
          %v1162 = vmul.f32 %v1112, 1.442695
          %v1163 = vpow.pop %v1162
          %v1164 = vmul.f32 %v1113, 1.442695
          %v1165 = vpow.pop %v1164
          %v1166 = vmul.f32 %v1114, 1.442695
          %v1167 = vpow.pop %v1166
          %v1168 = vmul.f32 %v1115, 1.442695
          %v1169 = vpow.pop %v1168
          %v1170 = vmul.f32 %v1116, 1.442695
          %v1171 = vpow.pop %v1170
          %v1172 = vmul.f32 %v1117, 1.442695
          %v1173 = vpow.pop %v1172
          %v1174 = vmul.f32 %v1118, 1.442695
          %v1175 = vpow.pop %v1174
          %v1176 = vmul.f32 %v1119, 1.442695
          %v1177 = vpow.pop %v1176
          %v1178 = vmul.f32 %v1120, 1.442695
          %v1179 = vpow.pop %v1178
          %v1180 = vmul.f32 %v1121, 1.442695
          %v1181 = vpow.pop %v1180
          %v1182 = vmul.f32 %v1122, 1.442695
          %v1183 = vpow.pop %v1182
          %v1184 = vmul.f32 %v1123, 1.442695
          %v1185 = vpow.pop %v1184
          %v1186 = vmul.f32 %v1124, 1.442695
          %v1187 = vpow.pop %v1186
          %v1188 = vmul.f32 %v1125, 1.442695
          %v1189 = vpow.pop %v1188
          %v1190 = vadd.f32 %v1127, 1.0
          %v1191 = vadd.f32 %v1129, 1.0
          %v1192 = vadd.f32 %v1131, 1.0
          %v1193 = vadd.f32 %v1133, 1.0
          %v1194 = vadd.f32 %v1135, 1.0
          %v1195 = vadd.f32 %v1137, 1.0
          %v1196 = vadd.f32 %v1139, 1.0
          %v1197 = vadd.f32 %v1141, 1.0
          %v1198 = vadd.f32 %v1143, 1.0
          %v1199 = vadd.f32 %v1145, 1.0
          %v1200 = vadd.f32 %v1147, 1.0
          %v1201 = vadd.f32 %v1149, 1.0
          %v1202 = vadd.f32 %v1151, 1.0
          %v1203 = vadd.f32 %v1153, 1.0
          %v1204 = vadd.f32 %v1155, 1.0
          %v1205 = vadd.f32 %v1157, 1.0
          %v1206 = vadd.f32 %v1159, 1.0
          %v1207 = vadd.f32 %v1161, 1.0
          %v1208 = vadd.f32 %v1163, 1.0
          %v1209 = vadd.f32 %v1165, 1.0
          %v1210 = vadd.f32 %v1167, 1.0
          %v1211 = vadd.f32 %v1169, 1.0
          %v1212 = vadd.f32 %v1171, 1.0
          %v1213 = vadd.f32 %v1173, 1.0
          %v1214 = vadd.f32 %v1175, 1.0
          %v1215 = vadd.f32 %v1177, 1.0
          %v1216 = vadd.f32 %v1179, 1.0
          %v1217 = vadd.f32 %v1181, 1.0
          %v1218 = vadd.f32 %v1183, 1.0
          %v1219 = vadd.f32 %v1185, 1.0
          %v1220 = vadd.f32 %v1187, 1.0
          %v1221 = vadd.f32 %v1189, 1.0
          %v1222 = vlog2.pop %v1190
          %v1223 = vmul.f32 %v1222, 0.6931472
          %v1224 = vlog2.pop %v1191
          %v1225 = vmul.f32 %v1224, 0.6931472
          %v1226 = vlog2.pop %v1192
          %v1227 = vmul.f32 %v1226, 0.6931472
          %v1228 = vlog2.pop %v1193
          %v1229 = vmul.f32 %v1228, 0.6931472
          %v1230 = vlog2.pop %v1194
          %v1231 = vmul.f32 %v1230, 0.6931472
          %v1232 = vlog2.pop %v1195
          %v1233 = vmul.f32 %v1232, 0.6931472
          %v1234 = vlog2.pop %v1196
          %v1235 = vmul.f32 %v1234, 0.6931472
          %v1236 = vlog2.pop %v1197
          %v1237 = vmul.f32 %v1236, 0.6931472
          %v1238 = vlog2.pop %v1198
          %v1239 = vmul.f32 %v1238, 0.6931472
          %v1240 = vlog2.pop %v1199
          %v1241 = vmul.f32 %v1240, 0.6931472
          %v1242 = vlog2.pop %v1200
          %v1243 = vmul.f32 %v1242, 0.6931472
          %v1244 = vlog2.pop %v1201
          %v1245 = vmul.f32 %v1244, 0.6931472
          %v1246 = vlog2.pop %v1202
          %v1247 = vmul.f32 %v1246, 0.6931472
          %v1248 = vlog2.pop %v1203
          %v1249 = vmul.f32 %v1248, 0.6931472
          %v1250 = vlog2.pop %v1204
          %v1251 = vmul.f32 %v1250, 0.6931472
          %v1252 = vlog2.pop %v1205
          %v1253 = vmul.f32 %v1252, 0.6931472
          %v1254 = vlog2.pop %v1206
          %v1255 = vmul.f32 %v1254, 0.6931472
          %v1256 = vlog2.pop %v1207
          %v1257 = vmul.f32 %v1256, 0.6931472
          %v1258 = vlog2.pop %v1208
          %v1259 = vmul.f32 %v1258, 0.6931472
          %v1260 = vlog2.pop %v1209
          %v1261 = vmul.f32 %v1260, 0.6931472
          %v1262 = vlog2.pop %v1210
          %v1263 = vmul.f32 %v1262, 0.6931472
          %v1264 = vlog2.pop %v1211
          %v1265 = vmul.f32 %v1264, 0.6931472
          %v1266 = vlog2.pop %v1212
          %v1267 = vmul.f32 %v1266, 0.6931472
          %v1268 = vlog2.pop %v1213
          %v1269 = vmul.f32 %v1268, 0.6931472
          %v1270 = vlog2.pop %v1214
          %v1271 = vmul.f32 %v1270, 0.6931472
          %v1272 = vlog2.pop %v1215
          %v1273 = vmul.f32 %v1272, 0.6931472
          %v1274 = vlog2.pop %v1216
          %v1275 = vmul.f32 %v1274, 0.6931472
          %v1276 = vlog2.pop %v1217
          %v1277 = vmul.f32 %v1276, 0.6931472
          %v1278 = vlog2.pop %v1218
          %v1279 = vmul.f32 %v1278, 0.6931472
          %v1280 = vlog2.pop %v1219
          %v1281 = vmul.f32 %v1280, 0.6931472
          %v1282 = vlog2.pop %v1220
          %v1283 = vmul.f32 %v1282, 0.6931472
          %v1284 = vlog2.pop %v1221
          %v1285 = vmul.f32 %v1284, 0.6931472
          %v1286 = vadd.f32 %v1030, %v1223
          %v1287 = vadd.f32 %v1031, %v1225
          %v1288 = vadd.f32 %v1032, %v1227
          %v1289 = vadd.f32 %v1033, %v1229
          %v1290 = vadd.f32 %v1034, %v1231
          %v1291 = vadd.f32 %v1035, %v1233
          %v1292 = vadd.f32 %v1036, %v1235
          %v1293 = vadd.f32 %v1037, %v1237
          %v1294 = vadd.f32 %v1038, %v1239
          %v1295 = vadd.f32 %v1039, %v1241
          %v1296 = vadd.f32 %v1040, %v1243
          %v1297 = vadd.f32 %v1041, %v1245
          %v1298 = vadd.f32 %v1042, %v1247
          %v1299 = vadd.f32 %v1043, %v1249
          %v1300 = vadd.f32 %v1044, %v1251
          %v1301 = vadd.f32 %v1045, %v1253
          %v1302 = vadd.f32 %v1046, %v1255
          %v1303 = vadd.f32 %v1047, %v1257
          %v1304 = vadd.f32 %v1048, %v1259
          %v1305 = vadd.f32 %v1049, %v1261
          %v1306 = vadd.f32 %v1050, %v1263
          %v1307 = vadd.f32 %v1051, %v1265
          %v1308 = vadd.f32 %v1052, %v1267
          %v1309 = vadd.f32 %v1053, %v1269
          %v1310 = vadd.f32 %v1054, %v1271
          %v1311 = vadd.f32 %v1055, %v1273
          %v1312 = vadd.f32 %v1056, %v1275
          %v1313 = vadd.f32 %v1057, %v1277
          %v1314 = vadd.f32 %v1058, %v1279
          %v1315 = vadd.f32 %v1059, %v1281
          %v1316 = vadd.f32 %v1060, %v1283
          %v1317 = vadd.f32 %v1061, %v1285
          %v1318 = vsel %vm958, %v1286, 0.0
          %v1319 = vsel %vm959, %v1287, 0.0
          %v1320 = vsel %vm960, %v1288, 0.0
          %v1321 = vsel %vm961, %v1289, 0.0
          %v1322 = vsel %vm962, %v1290, 0.0
          %v1323 = vsel %vm963, %v1291, 0.0
          %v1324 = vsel %vm964, %v1292, 0.0
          %v1325 = vsel %vm965, %v1293, 0.0
          %v1326 = vsel %vm966, %v1294, 0.0
          %v1327 = vsel %vm967, %v1295, 0.0
          %v1328 = vsel %vm968, %v1296, 0.0
          %v1329 = vsel %vm969, %v1297, 0.0
          %v1330 = vsel %vm970, %v1298, 0.0
          %v1331 = vsel %vm971, %v1299, 0.0
          %v1332 = vsel %vm972, %v1300, 0.0
          %v1333 = vsel %vm973, %v1301, 0.0
          %v1334 = vsel %vm974, %v1302, 0.0
          %v1335 = vsel %vm975, %v1303, 0.0
          %v1336 = vsel %vm976, %v1304, 0.0
          %v1337 = vsel %vm977, %v1305, 0.0
          %v1338 = vsel %vm978, %v1306, 0.0
          %v1339 = vsel %vm979, %v1307, 0.0
          %v1340 = vsel %vm980, %v1308, 0.0
          %v1341 = vsel %vm981, %v1309, 0.0
          %v1342 = vsel %vm982, %v1310, 0.0
          %v1343 = vsel %vm983, %v1311, 0.0
          %v1344 = vsel %vm984, %v1312, 0.0
          %v1345 = vsel %vm985, %v1313, 0.0
          %v1346 = vsel %vm986, %v1314, 0.0
          %v1347 = vsel %vm987, %v1315, 0.0
          %v1348 = vsel %vm988, %v1316, 0.0
          %v1349 = vsel %vm989, %v1317, 0.0
          %v1350 = vadd.f32 %v1318, %v1319
          %v1351 = vadd.f32 %v1350, %v1320
          %v1352 = vadd.f32 %v1351, %v1321
          %v1353 = vadd.f32 %v1352, %v1322
          %v1354 = vadd.f32 %v1353, %v1323
          %v1355 = vadd.f32 %v1354, %v1324
          %v1356 = vadd.f32 %v1355, %v1325
          %v1357 = vadd.f32 %v1356, %v1326
          %v1358 = vadd.f32 %v1357, %v1327
          %v1359 = vadd.f32 %v1358, %v1328
          %v1360 = vadd.f32 %v1359, %v1329
          %v1361 = vadd.f32 %v1360, %v1330
          %v1362 = vadd.f32 %v1361, %v1331
          %v1363 = vadd.f32 %v1362, %v1332
          %v1364 = vadd.f32 %v1363, %v1333
          %v1365 = vadd.f32 %v1364, %v1334
          %v1366 = vadd.f32 %v1365, %v1335
          %v1367 = vadd.f32 %v1366, %v1336
          %v1368 = vadd.f32 %v1367, %v1337
          %v1369 = vadd.f32 %v1368, %v1338
          %v1370 = vadd.f32 %v1369, %v1339
          %v1371 = vadd.f32 %v1370, %v1340
          %v1372 = vadd.f32 %v1371, %v1341
          %v1373 = vadd.f32 %v1372, %v1342
          %v1374 = vadd.f32 %v1373, %v1343
          %v1375 = vadd.f32 %v1374, %v1344
          %v1376 = vadd.f32 %v1375, %v1345
          %v1377 = vadd.f32 %v1376, %v1346
          %v1378 = vadd.f32 %v1377, %v1347
          %v1379 = vadd.f32 %v1378, %v1348
          %v1380 = vadd.f32 %v1379, %v1349
          %1381 = vadd.xlane.f32.xlu0 %v1380
          %v1382 = vpop.xlane.xlu0 %1381
          %v1383 = vrot.slane %v1382, 4
          %v1384 = vadd.f32 %v1382, %v1383
          %v1385 = vrot.slane %v1384, 2
          %v1386 = vadd.f32 %v1384, %v1385
          %v1387 = vrot.slane %v1386, 1
          %v1388 = vadd.f32 %v1386, %v1387
          %s1389 = vtos %v1388
          %s1390 = smul.u32 %s22, 128
          %s1391 = scalar_lea.vmem [#allocation2], %s1390
          %v1392 = vld [vmem:[%s1391] sm:$0xff]
          %v1393 = vld [vmem:[%s1391 + $0x8] sm:$0xff]
          %v1394 = vld [vmem:[%s1391 + $0x10] sm:$0xff]
          %v1395 = vld [vmem:[%s1391 + $0x18] sm:$0xff]
          %v1396 = vld [vmem:[%s1391 + $0x20] sm:$0xff]
          %v1397 = vld [vmem:[%s1391 + $0x28] sm:$0xff]
          %v1398 = vld [vmem:[%s1391 + $0x30] sm:$0xff]
          %v1399 = vld [vmem:[%s1391 + $0x38] sm:$0xff]
          %v1400 = vld [vmem:[%s1391 + $0x40] sm:$0xff]
          %v1401 = vld [vmem:[%s1391 + $0x48] sm:$0xff]
          %v1402 = vld [vmem:[%s1391 + $0x50] sm:$0xff]
          %v1403 = vld [vmem:[%s1391 + $0x58] sm:$0xff]
          %v1404 = vld [vmem:[%s1391 + $0x60] sm:$0xff]
          %v1405 = vld [vmem:[%s1391 + $0x68] sm:$0xff]
          %v1406 = vld [vmem:[%s1391 + $0x70] sm:$0xff]
          %v1407 = vld [vmem:[%s1391 + $0x78] sm:$0xff]
          %v1408 = vsub.f32 %v996, %v1392
          %v1409 = vsub.f32 %v996, %v1393
          %v1410 = vsub.f32 %v996, %v1394
          %v1411 = vsub.f32 %v996, %v1395
          %v1412 = vsub.f32 %v996, %v1396
          %v1413 = vsub.f32 %v996, %v1397
          %v1414 = vsub.f32 %v996, %v1398
          %v1415 = vsub.f32 %v996, %v1399
          %v1416 = vsub.f32 %v996, %v1400
          %v1417 = vsub.f32 %v996, %v1401
          %v1418 = vsub.f32 %v996, %v1402
          %v1419 = vsub.f32 %v996, %v1403
          %v1420 = vsub.f32 %v996, %v1404
          %v1421 = vsub.f32 %v996, %v1405
          %v1422 = vsub.f32 %v996, %v1406
          %v1423 = vsub.f32 %v996, %v1407
          %v1424 = vmax.f32 %v1408, 0.0
          %v1425 = vmax.f32 %v1409, 0.0
          %v1426 = vmax.f32 %v1410, 0.0
          %v1427 = vmax.f32 %v1411, 0.0
          %v1428 = vmax.f32 %v1412, 0.0
          %v1429 = vmax.f32 %v1413, 0.0
          %v1430 = vmax.f32 %v1414, 0.0
          %v1431 = vmax.f32 %v1415, 0.0
          %v1432 = vmax.f32 %v1416, 0.0
          %v1433 = vmax.f32 %v1417, 0.0
          %v1434 = vmax.f32 %v1418, 0.0
          %v1435 = vmax.f32 %v1419, 0.0
          %v1436 = vmax.f32 %v1420, 0.0
          %v1437 = vmax.f32 %v1421, 0.0
          %v1438 = vmax.f32 %v1422, 0.0
          %v1439 = vmax.f32 %v1423, 0.0
          %v1440 = vand.u32 2147483647, %v1408
          %v1441 = vand.u32 2147483647, %v1409
          %v1442 = vand.u32 2147483647, %v1410
          %v1443 = vand.u32 2147483647, %v1411
          %v1444 = vand.u32 2147483647, %v1412
          %v1445 = vand.u32 2147483647, %v1413
          %v1446 = vand.u32 2147483647, %v1414
          %v1447 = vand.u32 2147483647, %v1415
          %v1448 = vand.u32 2147483647, %v1416
          %v1449 = vand.u32 2147483647, %v1417
          %v1450 = vand.u32 2147483647, %v1418
          %v1451 = vand.u32 2147483647, %v1419
          %v1452 = vand.u32 2147483647, %v1420
          %v1453 = vand.u32 2147483647, %v1421
          %v1454 = vand.u32 2147483647, %v1422
          %v1455 = vand.u32 2147483647, %v1423
          %v1456 = vsub.f32 0.0, %v1440
          %v1457 = vsub.f32 0.0, %v1441
          %v1458 = vsub.f32 0.0, %v1442
          %v1459 = vsub.f32 0.0, %v1443
          %v1460 = vsub.f32 0.0, %v1444
          %v1461 = vsub.f32 0.0, %v1445
          %v1462 = vsub.f32 0.0, %v1446
          %v1463 = vsub.f32 0.0, %v1447
          %v1464 = vsub.f32 0.0, %v1448
          %v1465 = vsub.f32 0.0, %v1449
          %v1466 = vsub.f32 0.0, %v1450
          %v1467 = vsub.f32 0.0, %v1451
          %v1468 = vsub.f32 0.0, %v1452
          %v1469 = vsub.f32 0.0, %v1453
          %v1470 = vsub.f32 0.0, %v1454
          %v1471 = vsub.f32 0.0, %v1455
          %v1472 = vmul.f32 %v1456, 1.442695
          %v1473 = vpow.pop %v1472
          %v1474 = vmul.f32 %v1457, 1.442695
          %v1475 = vpow.pop %v1474
          %v1476 = vmul.f32 %v1458, 1.442695
          %v1477 = vpow.pop %v1476
          %v1478 = vmul.f32 %v1459, 1.442695
          %v1479 = vpow.pop %v1478
          %v1480 = vmul.f32 %v1460, 1.442695
          %v1481 = vpow.pop %v1480
          %v1482 = vmul.f32 %v1461, 1.442695
          %v1483 = vpow.pop %v1482
          %v1484 = vmul.f32 %v1462, 1.442695
          %v1485 = vpow.pop %v1484
          %v1486 = vmul.f32 %v1463, 1.442695
          %v1487 = vpow.pop %v1486
          %v1488 = vmul.f32 %v1464, 1.442695
          %v1489 = vpow.pop %v1488
          %v1490 = vmul.f32 %v1465, 1.442695
          %v1491 = vpow.pop %v1490
          %v1492 = vmul.f32 %v1466, 1.442695
          %v1493 = vpow.pop %v1492
          %v1494 = vmul.f32 %v1467, 1.442695
          %v1495 = vpow.pop %v1494
          %v1496 = vmul.f32 %v1468, 1.442695
          %v1497 = vpow.pop %v1496
          %v1498 = vmul.f32 %v1469, 1.442695
          %v1499 = vpow.pop %v1498
          %v1500 = vmul.f32 %v1470, 1.442695
          %v1501 = vpow.pop %v1500
          %v1502 = vmul.f32 %v1471, 1.442695
          %v1503 = vpow.pop %v1502
          %v1504 = vadd.f32 %v1473, 1.0
          %v1505 = vadd.f32 %v1475, 1.0
          %v1506 = vadd.f32 %v1477, 1.0
          %v1507 = vadd.f32 %v1479, 1.0
          %v1508 = vadd.f32 %v1481, 1.0
          %v1509 = vadd.f32 %v1483, 1.0
          %v1510 = vadd.f32 %v1485, 1.0
          %v1511 = vadd.f32 %v1487, 1.0
          %v1512 = vadd.f32 %v1489, 1.0
          %v1513 = vadd.f32 %v1491, 1.0
          %v1514 = vadd.f32 %v1493, 1.0
          %v1515 = vadd.f32 %v1495, 1.0
          %v1516 = vadd.f32 %v1497, 1.0
          %v1517 = vadd.f32 %v1499, 1.0
          %v1518 = vadd.f32 %v1501, 1.0
          %v1519 = vadd.f32 %v1503, 1.0
          %v1520 = vlog2.pop %v1504
          %v1521 = vmul.f32 %v1520, 0.6931472
          %v1522 = vlog2.pop %v1505
          %v1523 = vmul.f32 %v1522, 0.6931472
          %v1524 = vlog2.pop %v1506
          %v1525 = vmul.f32 %v1524, 0.6931472
          %v1526 = vlog2.pop %v1507
          %v1527 = vmul.f32 %v1526, 0.6931472
          %v1528 = vlog2.pop %v1508
          %v1529 = vmul.f32 %v1528, 0.6931472
          %v1530 = vlog2.pop %v1509
          %v1531 = vmul.f32 %v1530, 0.6931472
          %v1532 = vlog2.pop %v1510
          %v1533 = vmul.f32 %v1532, 0.6931472
          %v1534 = vlog2.pop %v1511
          %v1535 = vmul.f32 %v1534, 0.6931472
          %v1536 = vlog2.pop %v1512
          %v1537 = vmul.f32 %v1536, 0.6931472
          %v1538 = vlog2.pop %v1513
          %v1539 = vmul.f32 %v1538, 0.6931472
          %v1540 = vlog2.pop %v1514
          %v1541 = vmul.f32 %v1540, 0.6931472
          %v1542 = vlog2.pop %v1515
          %v1543 = vmul.f32 %v1542, 0.6931472
          %v1544 = vlog2.pop %v1516
          %v1545 = vmul.f32 %v1544, 0.6931472
          %v1546 = vlog2.pop %v1517
          %v1547 = vmul.f32 %v1546, 0.6931472
          %v1548 = vlog2.pop %v1518
          %v1549 = vmul.f32 %v1548, 0.6931472
          %v1550 = vlog2.pop %v1519
          %v1551 = vmul.f32 %v1550, 0.6931472
          %v1552 = vadd.f32 %v1424, %v1521
          %v1553 = vadd.f32 %v1425, %v1523
          %v1554 = vadd.f32 %v1426, %v1525
          %v1555 = vadd.f32 %v1427, %v1527
          %v1556 = vadd.f32 %v1428, %v1529
          %v1557 = vadd.f32 %v1429, %v1531
          %v1558 = vadd.f32 %v1430, %v1533
          %v1559 = vadd.f32 %v1431, %v1535
          %v1560 = vadd.f32 %v1432, %v1537
          %v1561 = vadd.f32 %v1433, %v1539
          %v1562 = vadd.f32 %v1434, %v1541
          %v1563 = vadd.f32 %v1435, %v1543
          %v1564 = vadd.f32 %v1436, %v1545
          %v1565 = vadd.f32 %v1437, %v1547
          %v1566 = vadd.f32 %v1438, %v1549
          %v1567 = vadd.f32 %v1439, %v1551
          %v1568 = vlaneseq
          %v1569 = vand.u32 %v1568, 127
          %vm1570 = vcmp.eq.s32.totalorder %v497, %v1569
          %vm1571 = vcmp.eq.s32.totalorder %v498, %v1569
          %vm1572 = vcmp.eq.s32.totalorder %v499, %v1569
          %vm1573 = vcmp.eq.s32.totalorder %v500, %v1569
          %vm1574 = vcmp.eq.s32.totalorder %v501, %v1569
          %vm1575 = vcmp.eq.s32.totalorder %v502, %v1569
          %vm1576 = vcmp.eq.s32.totalorder %v503, %v1569
          %vm1577 = vcmp.eq.s32.totalorder %v504, %v1569
          %vm1578 = vcmp.eq.s32.totalorder %v505, %v1569
          %vm1579 = vcmp.eq.s32.totalorder %v506, %v1569
          %vm1580 = vcmp.eq.s32.totalorder %v507, %v1569
          %vm1581 = vcmp.eq.s32.totalorder %v508, %v1569
          %vm1582 = vcmp.eq.s32.totalorder %v509, %v1569
          %vm1583 = vcmp.eq.s32.totalorder %v510, %v1569
          %vm1584 = vcmp.eq.s32.totalorder %v511, %v1569
          %vm1585 = vcmp.eq.s32.totalorder %v512, %v1569
          %v1586 = vsel %vm1570, %v1552, 0.0
          %v1587 = vsel %vm1571, %v1553, 0.0
          %v1588 = vsel %vm1572, %v1554, 0.0
          %v1589 = vsel %vm1573, %v1555, 0.0
          %v1590 = vsel %vm1574, %v1556, 0.0
          %v1591 = vsel %vm1575, %v1557, 0.0
          %v1592 = vsel %vm1576, %v1558, 0.0
          %v1593 = vsel %vm1577, %v1559, 0.0
          %v1594 = vsel %vm1578, %v1560, 0.0
          %v1595 = vsel %vm1579, %v1561, 0.0
          %v1596 = vsel %vm1580, %v1562, 0.0
          %v1597 = vsel %vm1581, %v1563, 0.0
          %v1598 = vsel %vm1582, %v1564, 0.0
          %v1599 = vsel %vm1583, %v1565, 0.0
          %v1600 = vsel %vm1584, %v1566, 0.0
          %v1601 = vsel %vm1585, %v1567, 0.0
          %v1602 = vadd.f32 %v1586, %v1587
          %v1603 = vadd.f32 %v1602, %v1588
          %v1604 = vadd.f32 %v1603, %v1589
          %v1605 = vadd.f32 %v1604, %v1590
          %v1606 = vadd.f32 %v1605, %v1591
          %v1607 = vadd.f32 %v1606, %v1592
          %v1608 = vadd.f32 %v1607, %v1593
          %v1609 = vadd.f32 %v1608, %v1594
          %v1610 = vadd.f32 %v1609, %v1595
          %v1611 = vadd.f32 %v1610, %v1596
          %v1612 = vadd.f32 %v1611, %v1597
          %v1613 = vadd.f32 %v1612, %v1598
          %v1614 = vadd.f32 %v1613, %v1599
          %v1615 = vadd.f32 %v1614, %v1600
          %v1616 = vadd.f32 %v1615, %v1601
          %1617 = vadd.xlane.f32.xlu0 %v1616
          %v1618 = vpop.xlane.xlu0 %1617
          %v1619 = vrot.slane %v1618, 4
          %v1620 = vadd.f32 %v1618, %v1619
          %v1621 = vrot.slane %v1620, 2
          %v1622 = vadd.f32 %v1620, %v1621
          %v1623 = vrot.slane %v1622, 1
          %v1624 = vadd.f32 %v1622, %v1623
          %s1625 = vtos %v1624
          %s1626 = ssub.f32 %s1389, %s1625
          %v1627 = vstv %s1626
          %v1628 = vadd.f32 %v1627, 0.0
          %1629 = vst [vmem:[%s214] sm:$0xff] %v1628
        $region44: #{tpu_custom_call.1} parent=35 // pred_fallthru
          _
        %s1630 = sand.u32 %s132, 1
        %s1631 = scalar_lea.sflag [#allocation6], %s1630
        %s1632 = sand.u32 %s132, 1
        %s1633 = smul.addr %s1632, 8
        %s1634 = scalar_lea.vmem [#allocation5], %s1633
        // Predicated region
        $region45: #{tpu_custom_call.1} parent=35 // pred_check
          %p1635 = pneg %p142
        $region46: #{tpu_custom_call.1} parent=35 // pred_check_branch
          %1637 = sbr.rel (%p1635) target = $region48
        $region47: #{tpu_custom_call.1} parent=35 // pred_region
          %1639 = vsyncadd %s1631, 0
          %s1640 = smul.addr %s22, 8
          %s1641 = scalar_lea.hbm %s4, %s1640
          %s1643 = sshll.u32 %s1634, 4
          %s1644 = int_to_ptr.vmem [resolvable:$true] %s1643
          %s1645 = sshll.u32 %s1641, 4
          %s1646 = int_to_ptr.hbm [resolvable:$true] %s1645
          %1648 = dma.vmem_to_hbm [thread:$0]  %s1644, 128, %s1646, %s1631
        $region48: #{tpu_custom_call.1} parent=35 // pred_fallthru
          _
      $region36: #{tpu_custom_call.1} parent=5 // pred_fallthru
        _
      %p1649 = scmp.le.s32.totalorder 2, %s13
      // Predicated region
      $region49: #{tpu_custom_call.1} parent=5 // pred_check
        %p1650 = pneg %p1649
      $region50: #{tpu_custom_call.1} parent=5 // pred_check_branch
        %1652 = sbr.rel (%p1650) target = $region52
      $region51: #{tpu_custom_call.1} parent=5 // pred_region
        %s1653 = ssub.s32 %s13, 2
        // Predicated region
        $region53: #{tpu_custom_call.1} parent=51 // pred_check
          %p1654 = pneg %p148
        $region54: #{tpu_custom_call.1} parent=51 // pred_check_branch
          %1656 = sbr.rel (%p1654) target = $region56
        $region55: #{tpu_custom_call.1} parent=51 // pred_region
          %s1657 = sand.u32 %s133, 1
          %s1658 = scalar_lea.sflag [#allocation6], %s1657
          %s1659 = sand.u32 %s133, 1
          %s1660 = smul.addr %s1659, 8
          %s1661 = scalar_lea.vmem [#allocation5], %s1660
          %1663 = dma.done %s1658, 128
        $region56: #{tpu_custom_call.1} parent=51 // pred_fallthru
          _
      $region52: #{tpu_custom_call.1} parent=5 // pred_fallthru
        _
    $region6: #{tpu_custom_call.1} parent=1 // loop_footer
      %s17 = sadd.s32 1, %s13
    $region7: #{tpu_custom_call.1} parent=1 // loop_footer_branch
      %12 = sbr.rel target = $region3
    $region8: #{tpu_custom_call.1} parent=1 // loop_exit
      _
    %1664 = vsyncpa [#allocation6], 1
    %s1665 = scalar_lea.sflag [#allocation6], 1
    %1666 = vsyncpa %s1665, 1

</llo_original>
